<compile_context>
chip_gen: v5e
topology: v5e:2x2
jax: 0.10.0
libtpu: 0.0.40
codegen_flags: <defaults>
</compile_context>

<pallas_src>
import jax
import jax.numpy as jnp
import numpy as np
from jax.experimental import pallas as pl
from jax.experimental.pallas import tpu as pltpu


def _round_up(x: int, m: int) -> int:
    return -(-x // m) * m


def selfcorr_stack_kernel(lr_ref, x_ref, w1_ref, b1_ref, w2_ref, b2_ref, o_ref):
    # lr_ref : (S, 1, 1)   f32  VMEM (resident)
    # x_ref  : (S, D, TM)  bf16 VMEM (streamed tile, lane dim = TM)
    # w1_ref : (S, H, D)   bf16 VMEM (resident; torch Linear(D,H).weight, native shape)
    # b1_ref : (S, H, 1)   f32  VMEM (resident)
    # w2_ref : (S, D, H)   bf16 VMEM (resident; torch Linear(H,D).weight, native shape)
    # b2_ref : (S, D, 1)   f32  VMEM (resident)
    # o_ref  : (S, D, TM)  f32  VMEM (streamed tile, lane-dense store)
    S = x_ref.shape[0]
    for s in range(S):                       # static unroll: S is tiny (3)
        xt_bf = x_ref[s]                     # (D, TM) bf16 MXU operand
        xt = xt_bf.astype(jnp.float32)       # f32 for the residual / epilogue
        # h^T = W1 @ x^T  -> (H, TM), f32 accumulate, lane dim = TM
        h = jnp.dot(w1_ref[s], xt_bf, preferred_element_type=jnp.float32) + b1_ref[s]
        h = jnp.maximum(h, 0.0)              # ReLU (f32)
        # W^T = W2 @ h^T  -> (D, TM)
        w = jnp.dot(w2_ref[s], h.astype(jnp.bfloat16),
                    preferred_element_type=jnp.float32) + b2_ref[s]
        # y^T = lr * x^T * W^T + x^T   (f32 epilogue, full-lane store)
        o_ref[s] = (lr_ref[s] * xt * w + xt).astype(o_ref.dtype)


def self_correlation_stack(x, w1, b1, w2, b2, lr, *, tile_m=256):
    """x: (S,N,I,D); w1: (S,H,D); b1: (S,H); w2: (S,D,H); b2: (S,D); lr: (S,).

    Weights are in torch-native Linear shapes: W1 = Linear(D,H).weight (H,D),
    W2 = Linear(H,D).weight (D,H).
    """
    S, N, I, D = x.shape
    H = w1.shape[1]
    M = N * I

    # Feature-minor layout: (S, D, M).  Lane axis = M -> lane-dense loads/stores.
    # bf16 stream halves the dominant x read traffic (residual sees bf16-quantized x).
    xt = jnp.transpose(x.reshape(S, M, D), (0, 2, 1)).astype(jnp.bfloat16)

    tile_m = max(128, min(int(tile_m), _round_up(M, 128)))
    tile_m = _round_up(tile_m, 128)
    m_pad = _round_up(M, tile_m)
    if m_pad != M:
        xt = jnp.pad(xt, ((0, 0), (0, 0), (0, m_pad - M)))

    w1_bf = w1.astype(jnp.bfloat16)                       # (S, H, D)
    w2_bf = w2.astype(jnp.bfloat16)                       # (S, D, H)
    b1r = b1.astype(jnp.float32).reshape(S, H, 1)
    b2r = b2.astype(jnp.float32).reshape(S, D, 1)
    lrr = lr.astype(jnp.float32).reshape(S, 1, 1)

    grid = (m_pad // tile_m,)

    flops = 4 * S * m_pad * D * H + 3 * S * m_pad * D
    bytes_accessed = (xt.size * 2 + w1_bf.size * 2 + w2_bf.size * 2
                      + b1r.size * 4 + b2r.size * 4 + lrr.size * 4
                      + S * D * m_pad * 4)

    out_t = pl.pallas_call(
        selfcorr_stack_kernel,
        out_shape=jax.ShapeDtypeStruct((S, D, m_pad), jnp.float32),
        grid=grid,
        in_specs=[
            pl.BlockSpec((S, 1, 1), lambda i: (0, 0, 0)),       # lr      (resident)
            pl.BlockSpec((S, D, tile_m), lambda i: (0, 0, i)),  # x^T     (streamed)
            pl.BlockSpec((S, H, D), lambda i: (0, 0, 0)),       # W1      (resident)
            pl.BlockSpec((S, H, 1), lambda i: (0, 0, 0)),       # b1      (resident)
            pl.BlockSpec((S, D, H), lambda i: (0, 0, 0)),       # W2      (resident)
            pl.BlockSpec((S, D, 1), lambda i: (0, 0, 0)),       # b2      (resident)
        ],
        out_specs=pl.BlockSpec((S, D, tile_m), lambda i: (0, 0, i)),
        compiler_params=pltpu.CompilerParams(
            dimension_semantics=("parallel",),        # shards M tiles across TCs on v7x
            vmem_limit_bytes=32 * 1024 * 1024,        # explicit; safe on v7x (64 MiB phys)
        ),
        cost_estimate=pl.CostEstimate(flops=flops, transcendentals=0,
                                      bytes_accessed=bytes_accessed),
    )(lrr, xt, w1_bf, b1r, w2_bf, b2r)

    out = jnp.transpose(out_t[:, :, :M], (0, 2, 1))   # (S, M, D)
    return out.reshape(S, N, I, D)


def _xavier_uniform(key, fan_in, fan_out, shape):
    bound = float(np.sqrt(6.0 / (fan_in + fan_out)))
    return jax.random.uniform(key, shape, dtype=jnp.float32, minval=-bound, maxval=bound)


def make_params(key, stack_size, d, h):
    """Per-stack xavier-init weights (bias = 0.01), torch-native Linear shapes."""
    w1s, b1s, w2s, b2s = [], [], [], []
    for _ in range(stack_size):
        k1, k2, key = jax.random.split(key, 3)
        w1s.append(_xavier_uniform(k1, d, h, (h, d)))   # Linear(d,h).weight : (h, d)
        b1s.append(jnp.full((h,), 0.01, dtype=jnp.float32))
        w2s.append(_xavier_uniform(k2, h, d, (d, h)))   # Linear(h,d).weight : (d, h)
        b2s.append(jnp.full((d,), 0.01, dtype=jnp.float32))
    w1 = jnp.stack(w1s)   # (S, H, D)
    b1 = jnp.stack(b1s)   # (S, H)
    w2 = jnp.stack(w2s)   # (S, D, H)
    b2 = jnp.stack(b2s)   # (S, D)
    lr = jnp.ones((stack_size,), dtype=jnp.float32)   # learning_rate = 1.0 per module
    return w1, b1, w2, b2, lr


def reference_matched(x, w1, b1, w2, b2, lr):
    """Same bf16-operand / f32-accumulate arithmetic the kernel uses (incl. bf16 x)."""
    S, N, I, D = x.shape
    xbf = x.reshape(S, N * I, D).astype(jnp.bfloat16)
    xf = xbf.astype(jnp.float32)
    h = jnp.einsum("smd,shd->smh", xbf, w1.astype(jnp.bfloat16),
                   preferred_element_type=jnp.float32) + b1[:, None, :]
    h = jnp.maximum(h, 0.0)
    wgt = jnp.einsum("smh,sdh->smd", h.astype(jnp.bfloat16), w2.astype(jnp.bfloat16),
                     preferred_element_type=jnp.float32) + b2[:, None, :]
    y = lr[:, None, None] * xf * wgt + xf
    return y.reshape(S, N, I, D)


def reference_f32(x, w1, b1, w2, b2, lr):
    """Pure f32 reference of the torch module (semantics sanity check)."""
    S, N, I, D = x.shape
    xf = x.reshape(S, N * I, D)
    h = jnp.maximum(jnp.einsum("smd,shd->smh", xf, w1) + b1[:, None, :], 0.0)
    wgt = jnp.einsum("smh,sdh->smd", h, w2) + b2[:, None, :]
    y = lr[:, None, None] * xf * wgt + xf
    return y.reshape(S, N, I, D)


if __name__ == "__main__":
    # S stacks of (N, I, D) neighborhoods; M = N*I = 512 rows batched per call so
    # the kernel is no longer launch/latency-bound and the M grid has 2 tiles.
    STACK, N, I, D, H = 3, 8, 64, 32, 64

    key = jax.random.PRNGKey(0)
    kx, kp = jax.random.split(key)
    x = jax.random.normal(kx, (STACK, N, I, D), dtype=jnp.float32)
    w1, b1, w2, b2, lr = make_params(kp, STACK, D, H)

    out = self_correlation_stack(x, w1, b1, w2, b2, lr, tile_m=256)
    out = jax.block_until_ready(out)
    assert out.shape == (STACK, N, I, D)

    out_np = np.asarray(out)
    # Check against a reference using identical bf16-operand / f32-accumulate math
    # (tolerance covers MXU-vs-XLA accumulation order and rare bf16 re-rounding flips).
    ref_m = np.asarray(reference_matched(x, w1, b1, w2, b2, lr))
    np.testing.assert_allclose(out_np, ref_m, rtol=5e-3, atol=5e-2)
    # Loose semantics check against the full-f32 torch-equivalent reference
    # (difference is only bf16 quantization of x / weights / hidden activations).
    ref_f = np.asarray(reference_f32(x, w1, b1, w2, b2, lr))
    np.testing.assert_allclose(out_np, ref_f, rtol=5e-2, atol=5e-1)

    print("KERNEL_OK")
</pallas_src>

<mosaic_0001>
module attributes {stable_mosaic.version = 11 : i64} {
  func.func @selfcorr_stack_kernel(%arg0: i32, %arg1: memref<3x1x1xf32, #tpu.memory_space<vmem>>, %arg2: memref<3x32x256xbf16, #tpu.memory_space<vmem>>, %arg3: memref<3x64x32xbf16, #tpu.memory_space<vmem>>, %arg4: memref<3x64x1xf32, #tpu.memory_space<vmem>>, %arg5: memref<3x32x64xbf16, #tpu.memory_space<vmem>>, %arg6: memref<3x32x1xf32, #tpu.memory_space<vmem>>, %arg7: memref<3x32x256xf32, #tpu.memory_space<vmem>>) attributes {dimension_semantics = [#tpu.dimension_semantics<parallel>], iteration_bounds = array<i64: 2>, scalar_prefetch = 0 : i64, scratch_operands = 0 : i64, tpu.core_type = #tpu.core_type<tc>, window_params = [{pipeline_mode = #tpu.pipeline_mode<synchronous>, transform_indices = @transform_0, window_bounds = array<i64: 3, 1, 1>}, {transform_indices = @transform_1, window_bounds = array<i64: 3, 32, 256>}, {pipeline_mode = #tpu.pipeline_mode<synchronous>, transform_indices = @transform_2, window_bounds = array<i64: 3, 64, 32>}, {pipeline_mode = #tpu.pipeline_mode<synchronous>, transform_indices = @transform_3, window_bounds = array<i64: 3, 64, 1>}, {pipeline_mode = #tpu.pipeline_mode<synchronous>, transform_indices = @transform_4, window_bounds = array<i64: 3, 32, 64>}, {pipeline_mode = #tpu.pipeline_mode<synchronous>, transform_indices = @transform_5, window_bounds = array<i64: 3, 32, 1>}, {transform_indices = @transform_6, window_bounds = array<i64: 3, 32, 256>}]} {
    %c0 = arith.constant 0 : index
    %c0_0 = arith.constant 0 : index
    %c0_1 = arith.constant 0 : index
    %0 = vector.load %arg2[%c0, %c0_0, %c0_1] : memref<3x32x256xbf16, #tpu.memory_space<vmem>>, vector<1x32x256xbf16>
    %1 = vector.shape_cast %0 : vector<1x32x256xbf16> to vector<32x256xbf16>
    %2 = arith.extf %1 : vector<32x256xbf16> to vector<32x256xf32>
    %c0_2 = arith.constant 0 : index
    %c0_3 = arith.constant 0 : index
    %c0_4 = arith.constant 0 : index
    %3 = vector.load %arg3[%c0_2, %c0_3, %c0_4] : memref<3x64x32xbf16, #tpu.memory_space<vmem>>, vector<1x64x32xbf16>
    %4 = vector.shape_cast %3 : vector<1x64x32xbf16> to vector<64x32xbf16>
    %cst = arith.constant dense<0.000000e+00> : vector<64x256xf32>
    %5 = tpu.matmul %4, %1, %cst {dimension_numbers = #tpu.dot_dimension_numbers<[1], [0], [0], [1], [0, 0, 1, 1], [], []>} : vector<64x32xbf16>, vector<32x256xbf16>, vector<64x256xf32> -> vector<64x256xf32>
    %c0_5 = arith.constant 0 : index
    %c0_6 = arith.constant 0 : index
    %c0_7 = arith.constant 0 : index
    %6 = vector.load %arg4[%c0_5, %c0_6, %c0_7] : memref<3x64x1xf32, #tpu.memory_space<vmem>>, vector<1x64x1xf32>
    %7 = vector.shape_cast %6 : vector<1x64x1xf32> to vector<64x1xf32>
    %8 = vector.broadcast %7 : vector<64x1xf32> to vector<64x256xf32>
    %9 = arith.addf %5, %8 : vector<64x256xf32>
    %cst_8 = arith.constant 0.000000e+00 : f32
    %10 = vector.broadcast %cst_8 : f32 to vector<64x256xf32>
    %11 = arith.maximumf %9, %10 : vector<64x256xf32>
    %c0_9 = arith.constant 0 : index
    %c0_10 = arith.constant 0 : index
    %c0_11 = arith.constant 0 : index
    %12 = vector.load %arg5[%c0_9, %c0_10, %c0_11] : memref<3x32x64xbf16, #tpu.memory_space<vmem>>, vector<1x32x64xbf16>
    %13 = vector.shape_cast %12 : vector<1x32x64xbf16> to vector<32x64xbf16>
    %14 = arith.truncf %11 : vector<64x256xf32> to vector<64x256xbf16>
    %cst_12 = arith.constant dense<0.000000e+00> : vector<32x256xf32>
    %15 = tpu.matmul %13, %14, %cst_12 {dimension_numbers = #tpu.dot_dimension_numbers<[1], [0], [0], [1], [0, 0, 1, 1], [], []>} : vector<32x64xbf16>, vector<64x256xbf16>, vector<32x256xf32> -> vector<32x256xf32>
    %c0_13 = arith.constant 0 : index
    %c0_14 = arith.constant 0 : index
    %c0_15 = arith.constant 0 : index
    %16 = vector.load %arg6[%c0_13, %c0_14, %c0_15] : memref<3x32x1xf32, #tpu.memory_space<vmem>>, vector<1x32x1xf32>
    %17 = vector.shape_cast %16 : vector<1x32x1xf32> to vector<32x1xf32>
    %18 = vector.broadcast %17 : vector<32x1xf32> to vector<32x256xf32>
    %19 = arith.addf %15, %18 : vector<32x256xf32>
    %c0_16 = arith.constant 0 : index
    %c0_17 = arith.constant 0 : index
    %c0_18 = arith.constant 0 : index
    %20 = vector.load %arg1[%c0_16, %c0_17, %c0_18] : memref<3x1x1xf32, #tpu.memory_space<vmem>>, vector<1x1x1xf32>
    %21 = vector.shape_cast %20 : vector<1x1x1xf32> to vector<1x1xf32>
    %22 = vector.broadcast %21 : vector<1x1xf32> to vector<32x256xf32>
    %23 = arith.mulf %22, %2 : vector<32x256xf32>
    %24 = arith.mulf %23, %19 : vector<32x256xf32>
    %25 = arith.addf %24, %2 : vector<32x256xf32>
    %c0_19 = arith.constant 0 : index
    %c0_20 = arith.constant 0 : index
    %c0_21 = arith.constant 0 : index
    %26 = vector.load %arg7[%c0_19, %c0_20, %c0_21] : memref<3x32x256xf32, #tpu.memory_space<vmem>>, vector<1x32x256xf32>
    %27 = vector.shape_cast %26 : vector<1x32x256xf32> to vector<32x256xf32>
    %28 = vector.shape_cast %25 : vector<32x256xf32> to vector<1x32x256xf32>
    tpu.vector_store %arg7[%c0_19, %c0_20, %c0_21], %28 {strides = array<i32>} : memref<3x32x256xf32, #tpu.memory_space<vmem>>, vector<1x32x256xf32>,
    %c1 = arith.constant 1 : index
    %c0_22 = arith.constant 0 : index
    %c0_23 = arith.constant 0 : index
    %29 = vector.load %arg2[%c1, %c0_22, %c0_23] : memref<3x32x256xbf16, #tpu.memory_space<vmem>>, vector<1x32x256xbf16>
    %30 = vector.shape_cast %29 : vector<1x32x256xbf16> to vector<32x256xbf16>
    %31 = arith.extf %30 : vector<32x256xbf16> to vector<32x256xf32>
    %c1_24 = arith.constant 1 : index
    %c0_25 = arith.constant 0 : index
    %c0_26 = arith.constant 0 : index
    %32 = vector.load %arg3[%c1_24, %c0_25, %c0_26] : memref<3x64x32xbf16, #tpu.memory_space<vmem>>, vector<1x64x32xbf16>
    %33 = vector.shape_cast %32 : vector<1x64x32xbf16> to vector<64x32xbf16>
    %cst_27 = arith.constant dense<0.000000e+00> : vector<64x256xf32>
    %34 = tpu.matmul %33, %30, %cst_27 {dimension_numbers = #tpu.dot_dimension_numbers<[1], [0], [0], [1], [0, 0, 1, 1], [], []>} : vector<64x32xbf16>, vector<32x256xbf16>, vector<64x256xf32> -> vector<64x256xf32>
    %c1_28 = arith.constant 1 : index
    %c0_29 = arith.constant 0 : index
    %c0_30 = arith.constant 0 : index
    %35 = vector.load %arg4[%c1_28, %c0_29, %c0_30] : memref<3x64x1xf32, #tpu.memory_space<vmem>>, vector<1x64x1xf32>
    %36 = vector.shape_cast %35 : vector<1x64x1xf32> to vector<64x1xf32>
    %37 = vector.broadcast %36 : vector<64x1xf32> to vector<64x256xf32>
    %38 = arith.addf %34, %37 : vector<64x256xf32>
    %cst_31 = arith.constant 0.000000e+00 : f32
    %39 = vector.broadcast %cst_31 : f32 to vector<64x256xf32>
    %40 = arith.maximumf %38, %39 : vector<64x256xf32>
    %c1_32 = arith.constant 1 : index
    %c0_33 = arith.constant 0 : index
    %c0_34 = arith.constant 0 : index
    %41 = vector.load %arg5[%c1_32, %c0_33, %c0_34] : memref<3x32x64xbf16, #tpu.memory_space<vmem>>, vector<1x32x64xbf16>
    %42 = vector.shape_cast %41 : vector<1x32x64xbf16> to vector<32x64xbf16>
    %43 = arith.truncf %40 : vector<64x256xf32> to vector<64x256xbf16>
    %cst_35 = arith.constant dense<0.000000e+00> : vector<32x256xf32>
    %44 = tpu.matmul %42, %43, %cst_35 {dimension_numbers = #tpu.dot_dimension_numbers<[1], [0], [0], [1], [0, 0, 1, 1], [], []>} : vector<32x64xbf16>, vector<64x256xbf16>, vector<32x256xf32> -> vector<32x256xf32>
    %c1_36 = arith.constant 1 : index
    %c0_37 = arith.constant 0 : index
    %c0_38 = arith.constant 0 : index
    %45 = vector.load %arg6[%c1_36, %c0_37, %c0_38] : memref<3x32x1xf32, #tpu.memory_space<vmem>>, vector<1x32x1xf32>
    %46 = vector.shape_cast %45 : vector<1x32x1xf32> to vector<32x1xf32>
    %47 = vector.broadcast %46 : vector<32x1xf32> to vector<32x256xf32>
    %48 = arith.addf %44, %47 : vector<32x256xf32>
    %c1_39 = arith.constant 1 : index
    %c0_40 = arith.constant 0 : index
    %c0_41 = arith.constant 0 : index
    %49 = vector.load %arg1[%c1_39, %c0_40, %c0_41] : memref<3x1x1xf32, #tpu.memory_space<vmem>>, vector<1x1x1xf32>
    %50 = vector.shape_cast %49 : vector<1x1x1xf32> to vector<1x1xf32>
    %51 = vector.broadcast %50 : vector<1x1xf32> to vector<32x256xf32>
    %52 = arith.mulf %51, %31 : vector<32x256xf32>
    %53 = arith.mulf %52, %48 : vector<32x256xf32>
    %54 = arith.addf %53, %31 : vector<32x256xf32>
    %c1_42 = arith.constant 1 : index
    %c0_43 = arith.constant 0 : index
    %c0_44 = arith.constant 0 : index
    %55 = vector.load %arg7[%c1_42, %c0_43, %c0_44] : memref<3x32x256xf32, #tpu.memory_space<vmem>>, vector<1x32x256xf32>
    %56 = vector.shape_cast %55 : vector<1x32x256xf32> to vector<32x256xf32>
    %57 = vector.shape_cast %54 : vector<32x256xf32> to vector<1x32x256xf32>
    tpu.vector_store %arg7[%c1_42, %c0_43, %c0_44], %57 {strides = array<i32>} : memref<3x32x256xf32, #tpu.memory_space<vmem>>, vector<1x32x256xf32>,
    %c2 = arith.constant 2 : index
    %c0_45 = arith.constant 0 : index
    %c0_46 = arith.constant 0 : index
    %58 = vector.load %arg2[%c2, %c0_45, %c0_46] : memref<3x32x256xbf16, #tpu.memory_space<vmem>>, vector<1x32x256xbf16>
    %59 = vector.shape_cast %58 : vector<1x32x256xbf16> to vector<32x256xbf16>
    %60 = arith.extf %59 : vector<32x256xbf16> to vector<32x256xf32>
    %c2_47 = arith.constant 2 : index
    %c0_48 = arith.constant 0 : index
    %c0_49 = arith.constant 0 : index
    %61 = vector.load %arg3[%c2_47, %c0_48, %c0_49] : memref<3x64x32xbf16, #tpu.memory_space<vmem>>, vector<1x64x32xbf16>
    %62 = vector.shape_cast %61 : vector<1x64x32xbf16> to vector<64x32xbf16>
    %cst_50 = arith.constant dense<0.000000e+00> : vector<64x256xf32>
    %63 = tpu.matmul %62, %59, %cst_50 {dimension_numbers = #tpu.dot_dimension_numbers<[1], [0], [0], [1], [0, 0, 1, 1], [], []>} : vector<64x32xbf16>, vector<32x256xbf16>, vector<64x256xf32> -> vector<64x256xf32>
    %c2_51 = arith.constant 2 : index
    %c0_52 = arith.constant 0 : index
    %c0_53 = arith.constant 0 : index
    %64 = vector.load %arg4[%c2_51, %c0_52, %c0_53] : memref<3x64x1xf32, #tpu.memory_space<vmem>>, vector<1x64x1xf32>
    %65 = vector.shape_cast %64 : vector<1x64x1xf32> to vector<64x1xf32>
    %66 = vector.broadcast %65 : vector<64x1xf32> to vector<64x256xf32>
    %67 = arith.addf %63, %66 : vector<64x256xf32>
    %cst_54 = arith.constant 0.000000e+00 : f32
    %68 = vector.broadcast %cst_54 : f32 to vector<64x256xf32>
    %69 = arith.maximumf %67, %68 : vector<64x256xf32>
    %c2_55 = arith.constant 2 : index
    %c0_56 = arith.constant 0 : index
    %c0_57 = arith.constant 0 : index
    %70 = vector.load %arg5[%c2_55, %c0_56, %c0_57] : memref<3x32x64xbf16, #tpu.memory_space<vmem>>, vector<1x32x64xbf16>
    %71 = vector.shape_cast %70 : vector<1x32x64xbf16> to vector<32x64xbf16>
    %72 = arith.truncf %69 : vector<64x256xf32> to vector<64x256xbf16>
    %cst_58 = arith.constant dense<0.000000e+00> : vector<32x256xf32>
    %73 = tpu.matmul %71, %72, %cst_58 {dimension_numbers = #tpu.dot_dimension_numbers<[1], [0], [0], [1], [0, 0, 1, 1], [], []>} : vector<32x64xbf16>, vector<64x256xbf16>, vector<32x256xf32> -> vector<32x256xf32>
    %c2_59 = arith.constant 2 : index
    %c0_60 = arith.constant 0 : index
    %c0_61 = arith.constant 0 : index
    %74 = vector.load %arg6[%c2_59, %c0_60, %c0_61] : memref<3x32x1xf32, #tpu.memory_space<vmem>>, vector<1x32x1xf32>
    %75 = vector.shape_cast %74 : vector<1x32x1xf32> to vector<32x1xf32>
    %76 = vector.broadcast %75 : vector<32x1xf32> to vector<32x256xf32>
    %77 = arith.addf %73, %76 : vector<32x256xf32>
    %c2_62 = arith.constant 2 : index
    %c0_63 = arith.constant 0 : index
    %c0_64 = arith.constant 0 : index
    %78 = vector.load %arg1[%c2_62, %c0_63, %c0_64] : memref<3x1x1xf32, #tpu.memory_space<vmem>>, vector<1x1x1xf32>
    %79 = vector.shape_cast %78 : vector<1x1x1xf32> to vector<1x1xf32>
    %80 = vector.broadcast %79 : vector<1x1xf32> to vector<32x256xf32>
    %81 = arith.mulf %80, %60 : vector<32x256xf32>
    %82 = arith.mulf %81, %77 : vector<32x256xf32>
    %83 = arith.addf %82, %60 : vector<32x256xf32>
    %c2_65 = arith.constant 2 : index
    %c0_66 = arith.constant 0 : index
    %c0_67 = arith.constant 0 : index
    %84 = vector.load %arg7[%c2_65, %c0_66, %c0_67] : memref<3x32x256xf32, #tpu.memory_space<vmem>>, vector<1x32x256xf32>
    %85 = vector.shape_cast %84 : vector<1x32x256xf32> to vector<32x256xf32>
    %86 = vector.shape_cast %83 : vector<32x256xf32> to vector<1x32x256xf32>
    tpu.vector_store %arg7[%c2_65, %c0_66, %c0_67], %86 {strides = array<i32>} : memref<3x32x256xf32, #tpu.memory_space<vmem>>, vector<1x32x256xf32>,
    return
  }
  func.func @transform_0(%arg0: i32) -> (i32, i32, i32) {
    %c0_i32 = arith.constant 0 : i32
    %c0_i32_0 = arith.constant 0 : i32
    %c0_i32_1 = arith.constant 0 : i32
    %c0_i32_2 = arith.constant 0 : i32
    return %c0_i32, %c0_i32_0, %c0_i32_1 : i32, i32, i32
  }
  func.func @transform_1(%arg0: i32) -> (i32, i32, i32) {
    %c0_i32 = arith.constant 0 : i32
    %c0_i32_0 = arith.constant 0 : i32
    %c0_i32_1 = arith.constant 0 : i32
    return %c0_i32, %c0_i32_0, %arg0 : i32, i32, i32
  }
  func.func @transform_2(%arg0: i32) -> (i32, i32, i32) {
    %c0_i32 = arith.constant 0 : i32
    %c0_i32_0 = arith.constant 0 : i32
    %c0_i32_1 = arith.constant 0 : i32
    %c0_i32_2 = arith.constant 0 : i32
    return %c0_i32, %c0_i32_0, %c0_i32_1 : i32, i32, i32
  }
  func.func @transform_3(%arg0: i32) -> (i32, i32, i32) {
    %c0_i32 = arith.constant 0 : i32
    %c0_i32_0 = arith.constant 0 : i32
    %c0_i32_1 = arith.constant 0 : i32
    %c0_i32_2 = arith.constant 0 : i32
    return %c0_i32, %c0_i32_0, %c0_i32_1 : i32, i32, i32
  }
  func.func @transform_4(%arg0: i32) -> (i32, i32, i32) {
    %c0_i32 = arith.constant 0 : i32
    %c0_i32_0 = arith.constant 0 : i32
    %c0_i32_1 = arith.constant 0 : i32
    %c0_i32_2 = arith.constant 0 : i32
    return %c0_i32, %c0_i32_0, %c0_i32_1 : i32, i32, i32
  }
  func.func @transform_5(%arg0: i32) -> (i32, i32, i32) {
    %c0_i32 = arith.constant 0 : i32
    %c0_i32_0 = arith.constant 0 : i32
    %c0_i32_1 = arith.constant 0 : i32
    %c0_i32_2 = arith.constant 0 : i32
    return %c0_i32, %c0_i32_0, %c0_i32_1 : i32, i32, i32
  }
  func.func @transform_6(%arg0: i32) -> (i32, i32, i32) {
    %c0_i32 = arith.constant 0 : i32
    %c0_i32_0 = arith.constant 0 : i32
    %c0_i32_1 = arith.constant 0 : i32
    return %c0_i32, %c0_i32_0, %arg0 : i32, i32, i32
  }
}

</mosaic_0001>

<llo_original>
// kernel: tpu_custom_call.1
$region0: #{tpu_custom_call.1}
  #allocation0 [shape = 'u32[]', space=smem, size = 0x4, offset = 0x4, fixed_abs, tag = 'smem constant byte address 0x4 - core index']
  #allocation1 [shape = 'u32[72,128]{1,0:T(1,128)}', space=vmem, size = 0x9000, scoped, tag = 'internal scratch']
  %s0 = inlined_call_operand.vmem [shape: f32[3,1,1], index: 0, kind: input, shape index: {}]
  %s1 = inlined_call_operand.vmem [shape: bf16[3,32,512], index: 1, kind: input, shape index: {}]
  %s2 = inlined_call_operand.vmem [shape: bf16[3,64,32], index: 2, kind: input, shape index: {}]
  %s3 = inlined_call_operand.vmem [shape: f32[3,64,1], index: 3, kind: input, shape index: {}]
  %s4 = inlined_call_operand.vmem [shape: bf16[3,32,64], index: 4, kind: input, shape index: {}]
  %s5 = inlined_call_operand.vmem [shape: f32[3,32,1], index: 5, kind: input, shape index: {}]
  %s6 = inlined_call_operand.hbm [shape: f32[3,32,512], index: 6, kind: output, shape index: {}]
  %s7 = sld [smem:[#allocation0]]
  $region95: #{tpu_custom_call.1} parent=0
    _
  %s9 = ssub.s32 1, %s7
  %s10 = scalar_select 0, %s9, %s7
  $region1: #{tpu_custom_call.1} parent=0
    #allocation2 [shape = 'u8[98304]{0}', space=vmem, size = 0x18000, scoped, tag = 'input window, operand 1']
    #allocation3 [shape = 'u8[196608]{0}', space=vmem, size = 0x30000, scoped, tag = 'output window, operand 0']
    #allocation4 [shape = 's32[2]{0}', space=sflag, size = 0x8, scoped, tag = 'scoped memory for tpu_custom_call.1']
    %11 = vsyncpa [#allocation4], 0
    %s12 = scalar_lea.sflag [#allocation4], 1
    %13 = vsyncpa %s12, 0
    loop: start=0, step=1, limit=4
    $region2: #{tpu_custom_call.1} parent=1 // loop_pre_header
      _
    $region3: #{tpu_custom_call.1} parent=1 // loop_header
      %s15 = sphi 0, %s19
      %p16 = scmp.ge.s32.totalorder %s15, 4
      %s23 = sphi 0, %s23
      %s25 = sphi 0, %s23
      %s26 = sphi 0, %s25
      %s40 = sphi 0, %s26
      %s46 = sphi 0, %s48
      %s49 = sphi 0, %s46
      %s50 = sphi 0, %s49
      %s66 = sphi 0, %s50
      %s70 = sphi 0, %s70
      %s72 = sphi 0, %s70
      %s73 = sphi 0, %s72
      %s87 = sphi 0, %s73
      %s91 = sphi 0, %s91
      %s93 = sphi 0, %s91
      %s94 = sphi 0, %s93
      %s108 = sphi 0, %s94
      %s112 = sphi 0, %s112
      %s114 = sphi 0, %s112
      %s115 = sphi 0, %s114
      %s129 = sphi 0, %s115
      %s133 = sphi 0, %s133
      %s135 = sphi 0, %s133
      %s136 = sphi 0, %s135
      %s150 = sphi 0, %s136
      %s156 = sphi 0, %s158
      %s159 = sphi 0, %s156
      %s160 = sphi 0, %s159
      %s176 = sphi 0, %s160
    $region4: #{tpu_custom_call.1} parent=1 // loop_header_branch
      %18 = sbr.rel (%p16) target = $region8
    $region5: #{tpu_custom_call.1} parent=1 // loop_body
      %s20 = ssub.s32 %s15, 1
      %s21 = ssub.s32 %s15, 2
      %s22 = sadd.s32 %s15, 1
      %s24 = sadd.s32 %s23, 1
      %p27 = scmp.eq.s32.totalorder %s15, 1
      %p28 = scmp.ne.s32.totalorder %s23, %s25
      %p29 = scmp.eq.s32.totalorder %s15, 0
      %p30 = por %p28, %p29
      %p31 = scmp.ne.s32.totalorder %s23, %s25
      %p32 = scmp.eq.s32.totalorder %s20, 1
      %p33 = por %p31, %p32
      %p34 = scmp.ne.s32.totalorder %s25, %s26
      %p35 = scmp.eq.s32.totalorder %s20, 0
      %p36 = por %p34, %p35
      %p37 = scmp.ne.s32.totalorder %s25, %s26
      %p38 = scmp.eq.s32.totalorder %s21, 1
      %p39 = por %p37, %p38
      %p41 = scmp.ne.s32.totalorder %s26, %s40
      %p42 = scmp.eq.s32.totalorder %s21, 0
      %p43 = por %p41, %p42
      %s44 = ssub.s32 %s15, %s22
      %p45 = scmp.eq.s32.totalorder %s44, 0
      %s47 = sadd.s32 %s46, 1
      %s48 = scalar_select %p45, %s46, %s47
      %p51 = pneg %p45
      %p52 = scmp.eq.s32.totalorder %s15, 1
      %p53 = por %p51, %p52
      %p54 = scmp.ne.s32.totalorder %s46, %s49
      %p55 = scmp.eq.s32.totalorder %s15, 0
      %p56 = por %p54, %p55
      %p57 = scmp.ne.s32.totalorder %s46, %s49
      %p58 = scmp.eq.s32.totalorder %s20, 1
      %p59 = por %p57, %p58
      %p60 = scmp.ne.s32.totalorder %s49, %s50
      %p61 = scmp.eq.s32.totalorder %s20, 0
      %p62 = por %p60, %p61
      %p63 = scmp.ne.s32.totalorder %s49, %s50
      %p64 = scmp.eq.s32.totalorder %s21, 1
      %p65 = por %p63, %p64
      %p67 = scmp.ne.s32.totalorder %s50, %s66
      %p68 = scmp.eq.s32.totalorder %s21, 0
      %p69 = por %p67, %p68
      %s71 = sadd.s32 %s70, 1
      %p74 = scmp.eq.s32.totalorder %s15, 1
      %p75 = scmp.ne.s32.totalorder %s70, %s72
      %p76 = scmp.eq.s32.totalorder %s15, 0
      %p77 = por %p75, %p76
      %p78 = scmp.ne.s32.totalorder %s70, %s72
      %p79 = scmp.eq.s32.totalorder %s20, 1
      %p80 = por %p78, %p79
      %p81 = scmp.ne.s32.totalorder %s72, %s73
      %p82 = scmp.eq.s32.totalorder %s20, 0
      %p83 = por %p81, %p82
      %p84 = scmp.ne.s32.totalorder %s72, %s73
      %p85 = scmp.eq.s32.totalorder %s21, 1
      %p86 = por %p84, %p85
      %p88 = scmp.ne.s32.totalorder %s73, %s87
      %p89 = scmp.eq.s32.totalorder %s21, 0
      %p90 = por %p88, %p89
      %s92 = sadd.s32 %s91, 1
      %p95 = scmp.eq.s32.totalorder %s15, 1
      %p96 = scmp.ne.s32.totalorder %s91, %s93
      %p97 = scmp.eq.s32.totalorder %s15, 0
      %p98 = por %p96, %p97
      %p99 = scmp.ne.s32.totalorder %s91, %s93
      %p100 = scmp.eq.s32.totalorder %s20, 1
      %p101 = por %p99, %p100
      %p102 = scmp.ne.s32.totalorder %s93, %s94
      %p103 = scmp.eq.s32.totalorder %s20, 0
      %p104 = por %p102, %p103
      %p105 = scmp.ne.s32.totalorder %s93, %s94
      %p106 = scmp.eq.s32.totalorder %s21, 1
      %p107 = por %p105, %p106
      %p109 = scmp.ne.s32.totalorder %s94, %s108
      %p110 = scmp.eq.s32.totalorder %s21, 0
      %p111 = por %p109, %p110
      %s113 = sadd.s32 %s112, 1
      %p116 = scmp.eq.s32.totalorder %s15, 1
      %p117 = scmp.ne.s32.totalorder %s112, %s114
      %p118 = scmp.eq.s32.totalorder %s15, 0
      %p119 = por %p117, %p118
      %p120 = scmp.ne.s32.totalorder %s112, %s114
      %p121 = scmp.eq.s32.totalorder %s20, 1
      %p122 = por %p120, %p121
      %p123 = scmp.ne.s32.totalorder %s114, %s115
      %p124 = scmp.eq.s32.totalorder %s20, 0
      %p125 = por %p123, %p124
      %p126 = scmp.ne.s32.totalorder %s114, %s115
      %p127 = scmp.eq.s32.totalorder %s21, 1
      %p128 = por %p126, %p127
      %p130 = scmp.ne.s32.totalorder %s115, %s129
      %p131 = scmp.eq.s32.totalorder %s21, 0
      %p132 = por %p130, %p131
      %s134 = sadd.s32 %s133, 1
      %p137 = scmp.eq.s32.totalorder %s15, 1
      %p138 = scmp.ne.s32.totalorder %s133, %s135
      %p139 = scmp.eq.s32.totalorder %s15, 0
      %p140 = por %p138, %p139
      %p141 = scmp.ne.s32.totalorder %s133, %s135
      %p142 = scmp.eq.s32.totalorder %s20, 1
      %p143 = por %p141, %p142
      %p144 = scmp.ne.s32.totalorder %s135, %s136
      %p145 = scmp.eq.s32.totalorder %s20, 0
      %p146 = por %p144, %p145
      %p147 = scmp.ne.s32.totalorder %s135, %s136
      %p148 = scmp.eq.s32.totalorder %s21, 1
      %p149 = por %p147, %p148
      %p151 = scmp.ne.s32.totalorder %s136, %s150
      %p152 = scmp.eq.s32.totalorder %s21, 0
      %p153 = por %p151, %p152
      %s154 = ssub.s32 %s15, %s22
      %p155 = scmp.eq.s32.totalorder %s154, 0
      %s157 = sadd.s32 %s156, 1
      %s158 = scalar_select %p155, %s156, %s157
      %p161 = pneg %p155
      %p162 = scmp.eq.s32.totalorder %s15, 1
      %p163 = por %p161, %p162
      %p164 = scmp.ne.s32.totalorder %s156, %s159
      %p165 = scmp.eq.s32.totalorder %s15, 0
      %p166 = por %p164, %p165
      %p167 = scmp.ne.s32.totalorder %s156, %s159
      %p168 = scmp.eq.s32.totalorder %s20, 1
      %p169 = por %p167, %p168
      %p170 = scmp.ne.s32.totalorder %s159, %s160
      %p171 = scmp.eq.s32.totalorder %s20, 0
      %p172 = por %p170, %p171
      %p173 = scmp.ne.s32.totalorder %s159, %s160
      %p174 = scmp.eq.s32.totalorder %s21, 1
      %p175 = por %p173, %p174
      %p177 = scmp.ne.s32.totalorder %s160, %s176
      %p178 = scmp.eq.s32.totalorder %s21, 0
      %p179 = por %p177, %p178
      %p180 = scmp.le.s32.totalorder 1, %s15
      %p181 = scmp.lt.s32.totalorder %s15, 3
      %p182 = pnand %p180, %p181
      %p183 = pneg %p182
      // Predicated region
      $region9: #{tpu_custom_call.1} parent=5 // pred_check
        _
      $region10: #{tpu_custom_call.1} parent=5 // pred_check_branch
        %185 = sbr.rel (%p182) target = $region12
      $region11: #{tpu_custom_call.1} parent=5 // pred_region
        %s186 = ssub.s32 %s15, 1
        // Predicated region
        $region13: #{tpu_custom_call.1} parent=11 // pred_check
          %p187 = pneg %p36
        $region14: #{tpu_custom_call.1} parent=11 // pred_check_branch
          %189 = sbr.rel (%p187) target = $region16
        $region15: #{tpu_custom_call.1} parent=11 // pred_region
          _
        $region16: #{tpu_custom_call.1} parent=11 // pred_fallthru
          _
        // Predicated region
        $region17: #{tpu_custom_call.1} parent=11 // pred_check
          %p190 = pneg %p83
        $region18: #{tpu_custom_call.1} parent=11 // pred_check_branch
          %192 = sbr.rel (%p190) target = $region20
        $region19: #{tpu_custom_call.1} parent=11 // pred_region
          _
        $region20: #{tpu_custom_call.1} parent=11 // pred_fallthru
          _
        // Predicated region
        $region21: #{tpu_custom_call.1} parent=11 // pred_check
          %p193 = pneg %p104
        $region22: #{tpu_custom_call.1} parent=11 // pred_check_branch
          %195 = sbr.rel (%p193) target = $region24
        $region23: #{tpu_custom_call.1} parent=11 // pred_region
          _
        $region24: #{tpu_custom_call.1} parent=11 // pred_fallthru
          _
        // Predicated region
        $region25: #{tpu_custom_call.1} parent=11 // pred_check
          %p196 = pneg %p125
        $region26: #{tpu_custom_call.1} parent=11 // pred_check_branch
          %198 = sbr.rel (%p196) target = $region28
        $region27: #{tpu_custom_call.1} parent=11 // pred_region
          _
        $region28: #{tpu_custom_call.1} parent=11 // pred_fallthru
          _
        // Predicated region
        $region29: #{tpu_custom_call.1} parent=11 // pred_check
          %p199 = pneg %p146
        $region30: #{tpu_custom_call.1} parent=11 // pred_check_branch
          %201 = sbr.rel (%p199) target = $region32
        $region31: #{tpu_custom_call.1} parent=11 // pred_region
          _
        $region32: #{tpu_custom_call.1} parent=11 // pred_fallthru
          _
      $region12: #{tpu_custom_call.1} parent=5 // pred_fallthru
        _
      %p202 = scmp.lt.s32.totalorder %s15, 2
      // Predicated region
      $region33: #{tpu_custom_call.1} parent=5 // pred_check
        %p203 = pneg %p202
      $region34: #{tpu_custom_call.1} parent=5 // pred_check_branch
        %205 = sbr.rel (%p203) target = $region36
      $region35: #{tpu_custom_call.1} parent=5 // pred_region
        // Predicated region
        $region37: #{tpu_custom_call.1} parent=35 // pred_check
          %p206 = pneg %p56
        $region38: #{tpu_custom_call.1} parent=35 // pred_check_branch
          %208 = sbr.rel (%p206) target = $region40
        $region39: #{tpu_custom_call.1} parent=35 // pred_region
          %s209 = sand.u32 %s46, 1
          %s210 = sand.u32 %s46, 1
          %s211 = smul.addr %s210, 96
          %s212 = scalar_lea.vmem [#allocation2], %s211
          %s213 = smul.u32 2, %s15
          %s214 = smul.addr %s213, 4
          %s215 = scalar_lea.vmem %s1, %s214
          // Predicated region
          $region41: #{tpu_custom_call.1} parent=39 // pred_check
            _
          $region42: #{tpu_custom_call.1} parent=39 // pred_check_branch
            %217 = sbr.rel (0) target = $region44
          $region43: #{tpu_custom_call.1} parent=39 // pred_region
            // Predicated region
            $region45: #{tpu_custom_call.1} parent=43 // pred_check
              _
            $region46: #{tpu_custom_call.1} parent=43 // pred_check_branch
              %219 = sbr.rel (0) target = $region48
            $region47: #{tpu_custom_call.1} parent=43 // pred_region
              // Predicated region
              $region60: #{tpu_custom_call.1} parent=47 // pred_check
                _
              $region61: #{tpu_custom_call.1} parent=47 // pred_check_branch
                %257 = sbr.rel (0) target = $region63
              $region62: #{tpu_custom_call.1} parent=47 // pred_region
                loop: start=0, step=1, limit=1
                $region64: #{tpu_custom_call.1} parent=62 // loop_pre_header
                  _
                $region65: #{tpu_custom_call.1} parent=62 // loop_header
                  %s259 = sphi 0, %s263
                  %p260 = scmp.ge.s32.totalorder %s259, 1
                  %s264 = sphi %s215, %s215
                  %s265 = sphi %s212, %s212
                $region66: #{tpu_custom_call.1} parent=62 // loop_header_branch
                  %262 = sbr.rel (%p260) target = $region70
                $region67: #{tpu_custom_call.1} parent=62 // loop_body
                  %v266 = vld [vmem:[%s264] sm:$0xff]
                  %267 = vst [vmem:[%s265] sm:$0xff] %v266
                  %v268 = vld [vmem:[%s264 + $0x10] sm:$0xff]
                  %269 = vst [vmem:[%s265 + $0x8] sm:$0xff] %v268
                  %v270 = vld [vmem:[%s264 + $0x20] sm:$0xff]
                  %271 = vst [vmem:[%s265 + $0x10] sm:$0xff] %v270
                  %v272 = vld [vmem:[%s264 + $0x30] sm:$0xff]
                  %273 = vst [vmem:[%s265 + $0x18] sm:$0xff] %v272
                  %v274 = vld [vmem:[%s264 + $0x40] sm:$0xff]
                  %275 = vst [vmem:[%s265 + $0x20] sm:$0xff] %v274
                  %v276 = vld [vmem:[%s264 + $0x50] sm:$0xff]
                  %277 = vst [vmem:[%s265 + $0x28] sm:$0xff] %v276
                  %v278 = vld [vmem:[%s264 + $0x60] sm:$0xff]
                  %279 = vst [vmem:[%s265 + $0x30] sm:$0xff] %v278
                  %v280 = vld [vmem:[%s264 + $0x70] sm:$0xff]
                  %281 = vst [vmem:[%s265 + $0x38] sm:$0xff] %v280
                  %v282 = vld [vmem:[%s264 + $0x80] sm:$0xff]
                  %283 = vst [vmem:[%s265 + $0x40] sm:$0xff] %v282
                  %v284 = vld [vmem:[%s264 + $0x90] sm:$0xff]
                  %285 = vst [vmem:[%s265 + $0x48] sm:$0xff] %v284
                  %v286 = vld [vmem:[%s264 + $0xa0] sm:$0xff]
                  %287 = vst [vmem:[%s265 + $0x50] sm:$0xff] %v286
                  %v288 = vld [vmem:[%s264 + $0xb0] sm:$0xff]
                  %289 = vst [vmem:[%s265 + $0x58] sm:$0xff] %v288
                $region68: #{tpu_custom_call.1} parent=62 // loop_footer
                  %s263 = sadd.s32 1, %s259
                $region69: #{tpu_custom_call.1} parent=62 // loop_footer_branch
                  %258 = sbr.rel target = $region65
                $region70: #{tpu_custom_call.1} parent=62 // loop_exit
                  _
              $region63: #{tpu_custom_call.1} parent=47 // pred_fallthru
                _
              // Predicated region
              $region71: #{tpu_custom_call.1} parent=47 // pred_check
                _
              $region72: #{tpu_custom_call.1} parent=47 // pred_check_branch
                %291 = sbr.rel target = $region74
              $region73: #{tpu_custom_call.1} parent=47 // pred_region
                _
              $region74: #{tpu_custom_call.1} parent=47 // pred_fallthru
                _
            $region48: #{tpu_custom_call.1} parent=43 // pred_fallthru
              _
            // Predicated region
            $region49: #{tpu_custom_call.1} parent=43 // pred_check
              _
            $region50: #{tpu_custom_call.1} parent=43 // pred_check_branch
              %221 = sbr.rel target = $region52
            $region51: #{tpu_custom_call.1} parent=43 // pred_region
              %s223 = ssub.s32 256, 1
              loop: start=0, step=1, limit=1
              $region53: #{tpu_custom_call.1} parent=51 // loop_pre_header
                _
              $region54: #{tpu_custom_call.1} parent=51 // loop_header
                %s225 = sphi 0, %s229
                %p226 = scmp.ge.s32.totalorder %s225, 1
                %s230 = sphi %s215, %s215
                %s231 = sphi %s212, %s212
              $region55: #{tpu_custom_call.1} parent=51 // loop_header_branch
                %228 = sbr.rel (%p226) target = $region59
              $region56: #{tpu_custom_call.1} parent=51 // loop_body
                %v232 = vld [vmem:[%s230] sm:%s223]
                %233 = vst [vmem:[%s231] sm:%s223] %v232
                %v234 = vld [vmem:[%s230 + $0x10] sm:%s223]
                %235 = vst [vmem:[%s231 + $0x8] sm:%s223] %v234
                %v236 = vld [vmem:[%s230 + $0x20] sm:%s223]
                %237 = vst [vmem:[%s231 + $0x10] sm:%s223] %v236
                %v238 = vld [vmem:[%s230 + $0x30] sm:%s223]
                %239 = vst [vmem:[%s231 + $0x18] sm:%s223] %v238
                %v240 = vld [vmem:[%s230 + $0x40] sm:%s223]
                %241 = vst [vmem:[%s231 + $0x20] sm:%s223] %v240
                %v242 = vld [vmem:[%s230 + $0x50] sm:%s223]
                %243 = vst [vmem:[%s231 + $0x28] sm:%s223] %v242
                %v244 = vld [vmem:[%s230 + $0x60] sm:%s223]
                %245 = vst [vmem:[%s231 + $0x30] sm:%s223] %v244
                %v246 = vld [vmem:[%s230 + $0x70] sm:%s223]
                %247 = vst [vmem:[%s231 + $0x38] sm:%s223] %v246
                %v248 = vld [vmem:[%s230 + $0x80] sm:%s223]
                %249 = vst [vmem:[%s231 + $0x40] sm:%s223] %v248
                %v250 = vld [vmem:[%s230 + $0x90] sm:%s223]
                %251 = vst [vmem:[%s231 + $0x48] sm:%s223] %v250
                %v252 = vld [vmem:[%s230 + $0xa0] sm:%s223]
                %253 = vst [vmem:[%s231 + $0x50] sm:%s223] %v252
                %v254 = vld [vmem:[%s230 + $0xb0] sm:%s223]
                %255 = vst [vmem:[%s231 + $0x58] sm:%s223] %v254
              $region57: #{tpu_custom_call.1} parent=51 // loop_footer
                %s229 = sadd.s32 1, %s225
              $region58: #{tpu_custom_call.1} parent=51 // loop_footer_branch
                %224 = sbr.rel target = $region54
              $region59: #{tpu_custom_call.1} parent=51 // loop_exit
                _
            $region52: #{tpu_custom_call.1} parent=43 // pred_fallthru
              _
          $region44: #{tpu_custom_call.1} parent=39 // pred_fallthru
            _
          %292 = vnop
        $region40: #{tpu_custom_call.1} parent=35 // pred_fallthru
          _
      $region36: #{tpu_custom_call.1} parent=5 // pred_fallthru
        _
      %p293 = scmp.le.s32.totalorder 1, %s15
      %p294 = scmp.lt.s32.totalorder %s15, 3
      %p295 = pnand %p293, %p294
      %p296 = pneg %p295
      // Predicated region
      $region75: #{tpu_custom_call.1} parent=5 // pred_check
        _
      $region76: #{tpu_custom_call.1} parent=5 // pred_check_branch
        %298 = sbr.rel (%p295) target = $region78
      $region77: #{tpu_custom_call.1} parent=5 // pred_region
        %s299 = ssub.s32 %s15, 1
        %s300 = sand.u32 %s49, 1
        %s301 = sand.u32 %s49, 1
        %s302 = smul.addr %s301, 96
        %s303 = scalar_lea.vmem [#allocation2], %s302
        // Predicated region
        $region79: #{tpu_custom_call.1} parent=77 // pred_check
          %p304 = pneg %p62
        $region80: #{tpu_custom_call.1} parent=77 // pred_check_branch
          %306 = sbr.rel (%p304) target = $region82
        $region81: #{tpu_custom_call.1} parent=77 // pred_region
          _
        $region82: #{tpu_custom_call.1} parent=77 // pred_fallthru
          _
        %p307 = pneg %p36
        %p308 = pneg %p33
        %s309 = sand.u32 %s49, 1
        %s310 = sand.u32 %s49, 1
        %s311 = smul.addr %s310, 96
        %s312 = scalar_lea.vmem [#allocation2], %s311
        %p313 = pneg %p62
        %p314 = pneg %p59
        %p315 = pneg %p83
        %p316 = pneg %p80
        %p317 = pneg %p104
        %p318 = pneg %p101
        %p319 = pneg %p125
        %p320 = pneg %p122
        %p321 = pneg %p146
        %p322 = pneg %p143
        %p323 = pneg %p172
        %p324 = pneg %p169
        %s325 = sand.u32 %s159, 1
        %s326 = scalar_lea.sflag [#allocation4], %s325
        %s327 = sand.u32 %s159, 1
        %s328 = smul.addr %s327, 192
        %s329 = scalar_lea.vmem [#allocation3], %s328
        %s330 = smul.u32 2, %s20
        %s331 = smul.u32 2, %s20
        %v333 = vld [vmem:[%s303] sm:$0xff]
        %v334 = vld [vmem:[%s303 + $0x8] sm:$0xff]
        %v335 = vld [vmem:[%s303 + $0x10] sm:$0xff]
        %v336 = vld [vmem:[%s303 + $0x18] sm:$0xff]
        %v337 = vunpack.c.l.bf16 %v333
        %v338 = vunpack.c.h.bf16 %v333
        %v339 = vunpack.c.l.bf16 %v334
        %v340 = vunpack.c.h.bf16 %v334
        %v341 = vunpack.c.l.bf16 %v335
        %v342 = vunpack.c.h.bf16 %v335
        %v343 = vunpack.c.l.bf16 %v336
        %v344 = vunpack.c.h.bf16 %v336
        %v345 = vld [vmem:[%s2] sm:$0xf]
        %v346 = vld [vmem:[%s2 + $0x4] sm:$0xf]
        %v347 = vld [vmem:[%s2 + $0x8] sm:$0xf]
        %v348 = vld [vmem:[%s2 + $0xc] sm:$0xf]
        %v349 = vld [vmem:[%s2 + $0x10] sm:$0xf]
        %v350 = vld [vmem:[%s2 + $0x14] sm:$0xf]
        %v351 = vld [vmem:[%s2 + $0x18] sm:$0xf]
        %v352 = vld [vmem:[%s2 + $0x1c] sm:$0xf]
        %v353 = vld [vmem:[%s3] sm:$0xff]
        %v354 = vld [vmem:[%s3 + $0x8] sm:$0xff]
        %v355 = vld [vmem:[%s3 + $0x10] sm:$0xff]
        %v356 = vld [vmem:[%s3 + $0x18] sm:$0xff]
        %v357 = vld [vmem:[%s3 + $0x20] sm:$0xff]
        %v358 = vld [vmem:[%s3 + $0x28] sm:$0xff]
        %v359 = vld [vmem:[%s3 + $0x30] sm:$0xff]
        %v360 = vld [vmem:[%s3 + $0x38] sm:$0xff]
        %362 = vset.pattern.permute.xlu0 0
        %363 = vperm.xlu0 %362, %v353
        %v364 = vpop.permute.xlu0 %363
        %367 = vset.pattern.permute.xlu0 0
        %368 = vperm.xlu0 %367, %v354
        %v369 = vpop.permute.xlu0 %368
        %372 = vset.pattern.permute.xlu0 0
        %373 = vperm.xlu0 %372, %v355
        %v374 = vpop.permute.xlu0 %373
        %377 = vset.pattern.permute.xlu0 0
        %378 = vperm.xlu0 %377, %v356
        %v379 = vpop.permute.xlu0 %378
        %382 = vset.pattern.permute.xlu0 0
        %383 = vperm.xlu0 %382, %v357
        %v384 = vpop.permute.xlu0 %383
        %387 = vset.pattern.permute.xlu0 0
        %388 = vperm.xlu0 %387, %v358
        %v389 = vpop.permute.xlu0 %388
        %392 = vset.pattern.permute.xlu0 0
        %393 = vperm.xlu0 %392, %v359
        %v394 = vpop.permute.xlu0 %393
        %397 = vset.pattern.permute.xlu0 0
        %398 = vperm.xlu0 %397, %v360
        %v399 = vpop.permute.xlu0 %398
        %v409 = vunpack.c.l.b16 %v345
        %v410 = vunpack.c.l.b16 %v346
        %v411 = vunpack.c.l.b16 %v347
        %v412 = vunpack.c.l.b16 %v348
        %v413 = vunpack.c.l.b16 %v349
        %v414 = vunpack.c.l.b16 %v350
        %v415 = vunpack.c.l.b16 %v351
        %v416 = vunpack.c.l.b16 %v352
        %v417 = vpack.c.b16 %v410, %v409
        %v418 = vpack.c.b16 %v412, %v411
        %v419 = vpack.c.b16 %v414, %v413
        %v420 = vpack.c.b16 %v416, %v415
        %v425 = vunpack.c.l.b16 %v333
        %v426 = vunpack.c.h.b16 %v333
        %v427 = vunpack.c.l.b16 %v334
        %v428 = vunpack.c.h.b16 %v334
        %v429 = vunpack.c.l.b16 %v335
        %v430 = vunpack.c.h.b16 %v335
        %v431 = vunpack.c.l.b16 %v336
        %v432 = vunpack.c.h.b16 %v336
        %v433 = vpack.c.b16 %v427, %v425
        %v434 = vpack.c.b16 %v428, %v426
        %v435 = vpack.c.b16 %v431, %v429
        %v436 = vpack.c.b16 %v432, %v430
        %vm441 = vcmask 261120
        %v443 = vsel %vm441, %v417, 0
        %v446 = vsel %vm441, %v418, 0
        %v449 = vsel %vm441, %v419, 0
        %v452 = vsel %vm441, %v420, 0
        %454 = vmatpush.bf16.msra.mxu0 0
        %455 = vmatpush.bf16.msra.mxu0 0
        %456 = vmatpush.bf16.msra.mxu0 0
        %457 = vmatpush.bf16.msra.mxu0 0
        %458 = vmatpush.bf16.msra.mxu0 0
        %459 = vmatpush.bf16.msra.mxu0 0
        %460 = vmatpush.bf16.msra.mxu0 %v435
        %461 = vmatpush.bf16.msra.mxu0 %v433
        %462 = vmatmul.bf16.gmra.mxu0 %v443
        %v463 = vpop.f32.mrf.mxu0
        %v464 = vadd.f32 %v364, %v463
        %v465 = vpop.f32.mrf.mxu0
        %v466 = vadd.f32 %v369, %v465
        %467 = vmatmul.bf16.gmra.mxu0 %v446
        %v468 = vpop.f32.mrf.mxu0
        %v469 = vadd.f32 %v374, %v468
        %v470 = vpop.f32.mrf.mxu0
        %v471 = vadd.f32 %v379, %v470
        %472 = vmatmul.bf16.gmra.mxu0 %v449
        %v473 = vpop.f32.mrf.mxu0
        %v474 = vadd.f32 %v384, %v473
        %v475 = vpop.f32.mrf.mxu0
        %v476 = vadd.f32 %v389, %v475
        %477 = vmatmul.bf16.gmra.mxu0 %v452
        %v478 = vpop.f32.mrf.mxu0
        %v479 = vadd.f32 %v394, %v478
        %v480 = vpop.f32.mrf.mxu0
        %v481 = vadd.f32 %v399, %v480
        %482 = vdwg.mxu0
        %483 = vmatpush.bf16.msra.mxu0 0
        %484 = vmatpush.bf16.msra.mxu0 0
        %485 = vmatpush.bf16.msra.mxu0 0
        %486 = vmatpush.bf16.msra.mxu0 0
        %487 = vmatpush.bf16.msra.mxu0 0
        %488 = vmatpush.bf16.msra.mxu0 0
        %489 = vmatpush.bf16.msra.mxu0 %v436
        %490 = vmatpush.bf16.msra.mxu0 %v434
        %491 = vmatmul.bf16.gmra.mxu0 %v443
        %v492 = vpop.f32.mrf.mxu0
        %v493 = vadd.f32 %v364, %v492
        %v494 = vpop.f32.mrf.mxu0
        %v495 = vadd.f32 %v369, %v494
        %496 = vmatmul.bf16.gmra.mxu0 %v446
        %v497 = vpop.f32.mrf.mxu0
        %v498 = vadd.f32 %v374, %v497
        %v499 = vpop.f32.mrf.mxu0
        %v500 = vadd.f32 %v379, %v499
        %501 = vmatmul.bf16.gmra.mxu0 %v449
        %v502 = vpop.f32.mrf.mxu0
        %v503 = vadd.f32 %v384, %v502
        %v504 = vpop.f32.mrf.mxu0
        %v505 = vadd.f32 %v389, %v504
        %506 = vmatmul.bf16.gmra.mxu0 %v452
        %v507 = vpop.f32.mrf.mxu0
        %v508 = vadd.f32 %v394, %v507
        %v509 = vpop.f32.mrf.mxu0
        %v510 = vadd.f32 %v399, %v509
        %511 = vdwg.mxu0
        %v512 = vmax.f32 %v464, 0.0
        %v513 = vmax.f32 %v493, 0.0
        %v514 = vmax.f32 %v466, 0.0
        %v515 = vmax.f32 %v495, 0.0
        %v516 = vmax.f32 %v469, 0.0
        %v517 = vmax.f32 %v498, 0.0
        %v518 = vmax.f32 %v471, 0.0
        %v519 = vmax.f32 %v500, 0.0
        %v520 = vmax.f32 %v474, 0.0
        %v521 = vmax.f32 %v503, 0.0
        %v522 = vmax.f32 %v476, 0.0
        %v523 = vmax.f32 %v505, 0.0
        %v524 = vmax.f32 %v479, 0.0
        %v525 = vmax.f32 %v508, 0.0
        %v526 = vmax.f32 %v481, 0.0
        %v527 = vmax.f32 %v510, 0.0
        %v528 = vld [vmem:[%s4] sm:$0xf]
        %v529 = vld [vmem:[%s4 + $0x4] sm:$0xf]
        %v530 = vld [vmem:[%s4 + $0x8] sm:$0xf]
        %v531 = vld [vmem:[%s4 + $0xc] sm:$0xf]
        %v532 = vpack.c.bf16 %v514, %v512
        %v533 = vpack.c.bf16 %v515, %v513
        %v534 = vpack.c.bf16 %v518, %v516
        %v535 = vpack.c.bf16 %v519, %v517
        %v536 = vpack.c.bf16 %v522, %v520
        %v537 = vpack.c.bf16 %v523, %v521
        %v538 = vpack.c.bf16 %v526, %v524
        %v539 = vpack.c.bf16 %v527, %v525
        %v540 = vld [vmem:[%s5] sm:$0xff]
        %v541 = vld [vmem:[%s5 + $0x8] sm:$0xff]
        %v542 = vld [vmem:[%s5 + $0x10] sm:$0xff]
        %v543 = vld [vmem:[%s5 + $0x18] sm:$0xff]
        %545 = vset.pattern.permute.xlu0 0
        %546 = vperm.xlu0 %545, %v540
        %v547 = vpop.permute.xlu0 %546
        %550 = vset.pattern.permute.xlu0 0
        %551 = vperm.xlu0 %550, %v541
        %v552 = vpop.permute.xlu0 %551
        %555 = vset.pattern.permute.xlu0 0
        %556 = vperm.xlu0 %555, %v542
        %v557 = vpop.permute.xlu0 %556
        %560 = vset.pattern.permute.xlu0 0
        %561 = vperm.xlu0 %560, %v543
        %v562 = vpop.permute.xlu0 %561
        %v568 = vunpack.c.l.b16 %v528
        %v569 = vunpack.c.l.b16 %v529
        %v570 = vunpack.c.l.b16 %v530
        %v571 = vunpack.c.l.b16 %v531
        %v572 = vpack.c.b16 %v569, %v568
        %v573 = vpack.c.b16 %v571, %v570
        %vm574 = vcmask 523264
        %v576 = vsel %vm574, %v572, 0
        %v579 = vsel %vm574, %v573, 0
        %581 = vmatpush.bf16.msra.mxu0 0
        %582 = vmatpush.bf16.msra.mxu0 0
        %583 = vmatpush.bf16.msra.mxu0 0
        %584 = vmatpush.bf16.msra.mxu0 0
        %585 = vmatpush.bf16.msra.mxu0 %v538
        %586 = vmatpush.bf16.msra.mxu0 %v536
        %587 = vmatpush.bf16.msra.mxu0 %v534
        %588 = vmatpush.bf16.msra.mxu0 %v532
        %589 = vmatmul.bf16.gmra.mxu0 %v576
        %v590 = vpop.f32.mrf.mxu0
        %v591 = vadd.f32 %v547, %v590
        %v592 = vpop.f32.mrf.mxu0
        %v593 = vadd.f32 %v552, %v592
        %594 = vmatmul.bf16.gmra.mxu0 %v579
        %v595 = vpop.f32.mrf.mxu0
        %v596 = vadd.f32 %v557, %v595
        %v597 = vpop.f32.mrf.mxu0
        %v598 = vadd.f32 %v562, %v597
        %599 = vdwg.mxu0
        %600 = vmatpush.bf16.msra.mxu0 0
        %601 = vmatpush.bf16.msra.mxu0 0
        %602 = vmatpush.bf16.msra.mxu0 0
        %603 = vmatpush.bf16.msra.mxu0 0
        %604 = vmatpush.bf16.msra.mxu0 %v539
        %605 = vmatpush.bf16.msra.mxu0 %v537
        %606 = vmatpush.bf16.msra.mxu0 %v535
        %607 = vmatpush.bf16.msra.mxu0 %v533
        %608 = vmatmul.bf16.gmra.mxu0 %v576
        %v609 = vpop.f32.mrf.mxu0
        %v610 = vadd.f32 %v547, %v609
        %v611 = vpop.f32.mrf.mxu0
        %v612 = vadd.f32 %v552, %v611
        %613 = vmatmul.bf16.gmra.mxu0 %v579
        %v614 = vpop.f32.mrf.mxu0
        %v615 = vadd.f32 %v557, %v614
        %v616 = vpop.f32.mrf.mxu0
        %v617 = vadd.f32 %v562, %v616
        %618 = vdwg.mxu0
        %v619 = vld [vmem:[%s0] sm:$0x1]
        %v621 = vperm.slane %v619, 0
        %622 = vset.pattern.permute.xlu0 0
        %623 = vperm.xlu0 %622, %v621
        %v624 = vpop.permute.xlu0 %623
        %v626 = vmul.f32 %v624, %v337
        %v627 = vmul.f32 %v624, %v338
        %v628 = vmul.f32 %v624, %v339
        %v629 = vmul.f32 %v624, %v340
        %v630 = vmul.f32 %v624, %v341
        %v631 = vmul.f32 %v624, %v342
        %v632 = vmul.f32 %v624, %v343
        %v633 = vmul.f32 %v624, %v344
        %v634 = vmul.f32 %v626, %v591
        %v635 = vmul.f32 %v627, %v610
        %v636 = vmul.f32 %v628, %v593
        %v637 = vmul.f32 %v629, %v612
        %v638 = vmul.f32 %v630, %v596
        %v639 = vmul.f32 %v631, %v615
        %v640 = vmul.f32 %v632, %v598
        %v641 = vmul.f32 %v633, %v617
        %v642 = vadd.f32 %v634, %v337
        %v643 = vadd.f32 %v635, %v338
        %v644 = vadd.f32 %v636, %v339
        %v645 = vadd.f32 %v637, %v340
        %v646 = vadd.f32 %v638, %v341
        %v647 = vadd.f32 %v639, %v342
        %v648 = vadd.f32 %v640, %v343
        %v649 = vadd.f32 %v641, %v344
        %650 = vst [vmem:[%s329] sm:$0xff] %v642
        %651 = vst [vmem:[%s329 + $0x8] sm:$0xff] %v643
        %652 = vst [vmem:[%s329 + $0x10] sm:$0xff] %v644
        %653 = vst [vmem:[%s329 + $0x18] sm:$0xff] %v645
        %654 = vst [vmem:[%s329 + $0x20] sm:$0xff] %v646
        %655 = vst [vmem:[%s329 + $0x28] sm:$0xff] %v647
        %656 = vst [vmem:[%s329 + $0x30] sm:$0xff] %v648
        %657 = vst [vmem:[%s329 + $0x38] sm:$0xff] %v649
        %s658 = scalar_lea.vmem %s303, 32 [#allocation2]
        %v659 = vld [vmem:[%s658] sm:$0xff]
        %v660 = vld [vmem:[%s658 + $0x8] sm:$0xff]
        %v661 = vld [vmem:[%s658 + $0x10] sm:$0xff]
        %v662 = vld [vmem:[%s658 + $0x18] sm:$0xff]
        %v663 = vunpack.c.l.bf16 %v659
        %v664 = vunpack.c.h.bf16 %v659
        %v665 = vunpack.c.l.bf16 %v660
        %v666 = vunpack.c.h.bf16 %v660
        %v667 = vunpack.c.l.bf16 %v661
        %v668 = vunpack.c.h.bf16 %v661
        %v669 = vunpack.c.l.bf16 %v662
        %v670 = vunpack.c.h.bf16 %v662
        %s671 = scalar_lea.vmem %s2, 32
        %v672 = vld [vmem:[%s671] sm:$0xf]
        %v673 = vld [vmem:[%s671 + $0x4] sm:$0xf]
        %v674 = vld [vmem:[%s671 + $0x8] sm:$0xf]
        %v675 = vld [vmem:[%s671 + $0xc] sm:$0xf]
        %v676 = vld [vmem:[%s671 + $0x10] sm:$0xf]
        %v677 = vld [vmem:[%s671 + $0x14] sm:$0xf]
        %v678 = vld [vmem:[%s671 + $0x18] sm:$0xf]
        %v679 = vld [vmem:[%s671 + $0x1c] sm:$0xf]
        %s680 = scalar_lea.vmem %s3, 64
        %v681 = vld [vmem:[%s680] sm:$0xff]
        %v682 = vld [vmem:[%s680 + $0x8] sm:$0xff]
        %v683 = vld [vmem:[%s680 + $0x10] sm:$0xff]
        %v684 = vld [vmem:[%s680 + $0x18] sm:$0xff]
        %v685 = vld [vmem:[%s680 + $0x20] sm:$0xff]
        %v686 = vld [vmem:[%s680 + $0x28] sm:$0xff]
        %v687 = vld [vmem:[%s680 + $0x30] sm:$0xff]
        %v688 = vld [vmem:[%s680 + $0x38] sm:$0xff]
        %690 = vset.pattern.permute.xlu0 0
        %691 = vperm.xlu0 %690, %v681
        %v692 = vpop.permute.xlu0 %691
        %695 = vset.pattern.permute.xlu0 0
        %696 = vperm.xlu0 %695, %v682
        %v697 = vpop.permute.xlu0 %696
        %700 = vset.pattern.permute.xlu0 0
        %701 = vperm.xlu0 %700, %v683
        %v702 = vpop.permute.xlu0 %701
        %705 = vset.pattern.permute.xlu0 0
        %706 = vperm.xlu0 %705, %v684
        %v707 = vpop.permute.xlu0 %706
        %710 = vset.pattern.permute.xlu0 0
        %711 = vperm.xlu0 %710, %v685
        %v712 = vpop.permute.xlu0 %711
        %715 = vset.pattern.permute.xlu0 0
        %716 = vperm.xlu0 %715, %v686
        %v717 = vpop.permute.xlu0 %716
        %720 = vset.pattern.permute.xlu0 0
        %721 = vperm.xlu0 %720, %v687
        %v722 = vpop.permute.xlu0 %721
        %725 = vset.pattern.permute.xlu0 0
        %726 = vperm.xlu0 %725, %v688
        %v727 = vpop.permute.xlu0 %726
        %v737 = vunpack.c.l.b16 %v672
        %v738 = vunpack.c.l.b16 %v673
        %v739 = vunpack.c.l.b16 %v674
        %v740 = vunpack.c.l.b16 %v675
        %v741 = vunpack.c.l.b16 %v676
        %v742 = vunpack.c.l.b16 %v677
        %v743 = vunpack.c.l.b16 %v678
        %v744 = vunpack.c.l.b16 %v679
        %v745 = vpack.c.b16 %v738, %v737
        %v746 = vpack.c.b16 %v740, %v739
        %v747 = vpack.c.b16 %v742, %v741
        %v748 = vpack.c.b16 %v744, %v743
        %v753 = vunpack.c.l.b16 %v659
        %v754 = vunpack.c.h.b16 %v659
        %v755 = vunpack.c.l.b16 %v660
        %v756 = vunpack.c.h.b16 %v660
        %v757 = vunpack.c.l.b16 %v661
        %v758 = vunpack.c.h.b16 %v661
        %v759 = vunpack.c.l.b16 %v662
        %v760 = vunpack.c.h.b16 %v662
        %v761 = vpack.c.b16 %v755, %v753
        %v762 = vpack.c.b16 %v756, %v754
        %v763 = vpack.c.b16 %v759, %v757
        %v764 = vpack.c.b16 %v760, %v758
        %v770 = vsel %vm441, %v745, 0
        %v773 = vsel %vm441, %v746, 0
        %v776 = vsel %vm441, %v747, 0
        %v779 = vsel %vm441, %v748, 0
        %781 = vmatpush.bf16.msra.mxu0 0
        %782 = vmatpush.bf16.msra.mxu0 0
        %783 = vmatpush.bf16.msra.mxu0 0
        %784 = vmatpush.bf16.msra.mxu0 0
        %785 = vmatpush.bf16.msra.mxu0 0
        %786 = vmatpush.bf16.msra.mxu0 0
        %787 = vmatpush.bf16.msra.mxu0 %v763
        %788 = vmatpush.bf16.msra.mxu0 %v761
        %789 = vmatmul.bf16.gmra.mxu0 %v770
        %v790 = vpop.f32.mrf.mxu0
        %v791 = vadd.f32 %v692, %v790
        %v792 = vpop.f32.mrf.mxu0
        %v793 = vadd.f32 %v697, %v792
        %794 = vmatmul.bf16.gmra.mxu0 %v773
        %v795 = vpop.f32.mrf.mxu0
        %v796 = vadd.f32 %v702, %v795
        %v797 = vpop.f32.mrf.mxu0
        %v798 = vadd.f32 %v707, %v797
        %799 = vmatmul.bf16.gmra.mxu0 %v776
        %v800 = vpop.f32.mrf.mxu0
        %v801 = vadd.f32 %v712, %v800
        %v802 = vpop.f32.mrf.mxu0
        %v803 = vadd.f32 %v717, %v802
        %804 = vmatmul.bf16.gmra.mxu0 %v779
        %v805 = vpop.f32.mrf.mxu0
        %v806 = vadd.f32 %v722, %v805
        %v807 = vpop.f32.mrf.mxu0
        %v808 = vadd.f32 %v727, %v807
        %809 = vdwg.mxu0
        %810 = vmatpush.bf16.msra.mxu0 0
        %811 = vmatpush.bf16.msra.mxu0 0
        %812 = vmatpush.bf16.msra.mxu0 0
        %813 = vmatpush.bf16.msra.mxu0 0
        %814 = vmatpush.bf16.msra.mxu0 0
        %815 = vmatpush.bf16.msra.mxu0 0
        %816 = vmatpush.bf16.msra.mxu0 %v764
        %817 = vmatpush.bf16.msra.mxu0 %v762
        %818 = vmatmul.bf16.gmra.mxu0 %v770
        %v819 = vpop.f32.mrf.mxu0
        %v820 = vadd.f32 %v692, %v819
        %v821 = vpop.f32.mrf.mxu0
        %v822 = vadd.f32 %v697, %v821
        %823 = vmatmul.bf16.gmra.mxu0 %v773
        %v824 = vpop.f32.mrf.mxu0
        %v825 = vadd.f32 %v702, %v824
        %v826 = vpop.f32.mrf.mxu0
        %v827 = vadd.f32 %v707, %v826
        %828 = vmatmul.bf16.gmra.mxu0 %v776
        %v829 = vpop.f32.mrf.mxu0
        %v830 = vadd.f32 %v712, %v829
        %v831 = vpop.f32.mrf.mxu0
        %v832 = vadd.f32 %v717, %v831
        %833 = vmatmul.bf16.gmra.mxu0 %v779
        %v834 = vpop.f32.mrf.mxu0
        %v835 = vadd.f32 %v722, %v834
        %v836 = vpop.f32.mrf.mxu0
        %v837 = vadd.f32 %v727, %v836
        %838 = vdwg.mxu0
        %v839 = vmax.f32 %v791, 0.0
        %v840 = vmax.f32 %v820, 0.0
        %v841 = vmax.f32 %v793, 0.0
        %v842 = vmax.f32 %v822, 0.0
        %v843 = vmax.f32 %v796, 0.0
        %v844 = vmax.f32 %v825, 0.0
        %v845 = vmax.f32 %v798, 0.0
        %v846 = vmax.f32 %v827, 0.0
        %v847 = vmax.f32 %v801, 0.0
        %v848 = vmax.f32 %v830, 0.0
        %v849 = vmax.f32 %v803, 0.0
        %v850 = vmax.f32 %v832, 0.0
        %v851 = vmax.f32 %v806, 0.0
        %v852 = vmax.f32 %v835, 0.0
        %v853 = vmax.f32 %v808, 0.0
        %v854 = vmax.f32 %v837, 0.0
        %s855 = scalar_lea.vmem %s4, 16
        %v856 = vld [vmem:[%s855] sm:$0xf]
        %v857 = vld [vmem:[%s855 + $0x4] sm:$0xf]
        %v858 = vld [vmem:[%s855 + $0x8] sm:$0xf]
        %v859 = vld [vmem:[%s855 + $0xc] sm:$0xf]
        %v860 = vpack.c.bf16 %v841, %v839
        %v861 = vpack.c.bf16 %v842, %v840
        %v862 = vpack.c.bf16 %v845, %v843
        %v863 = vpack.c.bf16 %v846, %v844
        %v864 = vpack.c.bf16 %v849, %v847
        %v865 = vpack.c.bf16 %v850, %v848
        %v866 = vpack.c.bf16 %v853, %v851
        %v867 = vpack.c.bf16 %v854, %v852
        %s868 = scalar_lea.vmem %s5, 32
        %v869 = vld [vmem:[%s868] sm:$0xff]
        %v870 = vld [vmem:[%s868 + $0x8] sm:$0xff]
        %v871 = vld [vmem:[%s868 + $0x10] sm:$0xff]
        %v872 = vld [vmem:[%s868 + $0x18] sm:$0xff]
        %874 = vset.pattern.permute.xlu0 0
        %875 = vperm.xlu0 %874, %v869
        %v876 = vpop.permute.xlu0 %875
        %879 = vset.pattern.permute.xlu0 0
        %880 = vperm.xlu0 %879, %v870
        %v881 = vpop.permute.xlu0 %880
        %884 = vset.pattern.permute.xlu0 0
        %885 = vperm.xlu0 %884, %v871
        %v886 = vpop.permute.xlu0 %885
        %889 = vset.pattern.permute.xlu0 0
        %890 = vperm.xlu0 %889, %v872
        %v891 = vpop.permute.xlu0 %890
        %v897 = vunpack.c.l.b16 %v856
        %v898 = vunpack.c.l.b16 %v857
        %v899 = vunpack.c.l.b16 %v858
        %v900 = vunpack.c.l.b16 %v859
        %v901 = vpack.c.b16 %v898, %v897
        %v902 = vpack.c.b16 %v900, %v899
        %v904 = vsel %vm574, %v901, 0
        %v907 = vsel %vm574, %v902, 0
        %909 = vmatpush.bf16.msra.mxu0 0
        %910 = vmatpush.bf16.msra.mxu0 0
        %911 = vmatpush.bf16.msra.mxu0 0
        %912 = vmatpush.bf16.msra.mxu0 0
        %913 = vmatpush.bf16.msra.mxu0 %v866
        %914 = vmatpush.bf16.msra.mxu0 %v864
        %915 = vmatpush.bf16.msra.mxu0 %v862
        %916 = vmatpush.bf16.msra.mxu0 %v860
        %917 = vmatmul.bf16.gmra.mxu0 %v904
        %v918 = vpop.f32.mrf.mxu0
        %v919 = vadd.f32 %v876, %v918
        %v920 = vpop.f32.mrf.mxu0
        %v921 = vadd.f32 %v881, %v920
        %922 = vmatmul.bf16.gmra.mxu0 %v907
        %v923 = vpop.f32.mrf.mxu0
        %v924 = vadd.f32 %v886, %v923
        %v925 = vpop.f32.mrf.mxu0
        %v926 = vadd.f32 %v891, %v925
        %927 = vdwg.mxu0
        %928 = vmatpush.bf16.msra.mxu0 0
        %929 = vmatpush.bf16.msra.mxu0 0
        %930 = vmatpush.bf16.msra.mxu0 0
        %931 = vmatpush.bf16.msra.mxu0 0
        %932 = vmatpush.bf16.msra.mxu0 %v867
        %933 = vmatpush.bf16.msra.mxu0 %v865
        %934 = vmatpush.bf16.msra.mxu0 %v863
        %935 = vmatpush.bf16.msra.mxu0 %v861
        %936 = vmatmul.bf16.gmra.mxu0 %v904
        %v937 = vpop.f32.mrf.mxu0
        %v938 = vadd.f32 %v876, %v937
        %v939 = vpop.f32.mrf.mxu0
        %v940 = vadd.f32 %v881, %v939
        %941 = vmatmul.bf16.gmra.mxu0 %v907
        %v942 = vpop.f32.mrf.mxu0
        %v943 = vadd.f32 %v886, %v942
        %v944 = vpop.f32.mrf.mxu0
        %v945 = vadd.f32 %v891, %v944
        %946 = vdwg.mxu0
        %s947 = scalar_lea.vmem %s0, 1
        %v948 = vld [vmem:[%s947] sm:$0x1]
        %v950 = vperm.slane %v948, 0
        %951 = vset.pattern.permute.xlu0 0
        %952 = vperm.xlu0 %951, %v950
        %v953 = vpop.permute.xlu0 %952
        %v955 = vmul.f32 %v953, %v663
        %v956 = vmul.f32 %v953, %v664
        %v957 = vmul.f32 %v953, %v665
        %v958 = vmul.f32 %v953, %v666
        %v959 = vmul.f32 %v953, %v667
        %v960 = vmul.f32 %v953, %v668
        %v961 = vmul.f32 %v953, %v669
        %v962 = vmul.f32 %v953, %v670
        %v963 = vmul.f32 %v955, %v919
        %v964 = vmul.f32 %v956, %v938
        %v965 = vmul.f32 %v957, %v921
        %v966 = vmul.f32 %v958, %v940
        %v967 = vmul.f32 %v959, %v924
        %v968 = vmul.f32 %v960, %v943
        %v969 = vmul.f32 %v961, %v926
        %v970 = vmul.f32 %v962, %v945
        %v971 = vadd.f32 %v963, %v663
        %v972 = vadd.f32 %v964, %v664
        %v973 = vadd.f32 %v965, %v665
        %v974 = vadd.f32 %v966, %v666
        %v975 = vadd.f32 %v967, %v667
        %v976 = vadd.f32 %v968, %v668
        %v977 = vadd.f32 %v969, %v669
        %v978 = vadd.f32 %v970, %v670
        %s979 = scalar_lea.vmem %s329, 64 [#allocation3]
        %980 = vst [vmem:[%s979] sm:$0xff] %v971
        %981 = vst [vmem:[%s979 + $0x8] sm:$0xff] %v972
        %982 = vst [vmem:[%s979 + $0x10] sm:$0xff] %v973
        %983 = vst [vmem:[%s979 + $0x18] sm:$0xff] %v974
        %984 = vst [vmem:[%s979 + $0x20] sm:$0xff] %v975
        %985 = vst [vmem:[%s979 + $0x28] sm:$0xff] %v976
        %986 = vst [vmem:[%s979 + $0x30] sm:$0xff] %v977
        %987 = vst [vmem:[%s979 + $0x38] sm:$0xff] %v978
        %s988 = scalar_lea.vmem %s303, 64 [#allocation2]
        %v989 = vld [vmem:[%s988] sm:$0xff]
        %v990 = vld [vmem:[%s988 + $0x8] sm:$0xff]
        %v991 = vld [vmem:[%s988 + $0x10] sm:$0xff]
        %v992 = vld [vmem:[%s988 + $0x18] sm:$0xff]
        %v993 = vunpack.c.l.bf16 %v989
        %v994 = vunpack.c.h.bf16 %v989
        %v995 = vunpack.c.l.bf16 %v990
        %v996 = vunpack.c.h.bf16 %v990
        %v997 = vunpack.c.l.bf16 %v991
        %v998 = vunpack.c.h.bf16 %v991
        %v999 = vunpack.c.l.bf16 %v992
        %v1000 = vunpack.c.h.bf16 %v992
        %s1001 = scalar_lea.vmem %s2, 64
        %v1002 = vld [vmem:[%s1001] sm:$0xf]
        %v1003 = vld [vmem:[%s1001 + $0x4] sm:$0xf]
        %v1004 = vld [vmem:[%s1001 + $0x8] sm:$0xf]
        %v1005 = vld [vmem:[%s1001 + $0xc] sm:$0xf]
        %v1006 = vld [vmem:[%s1001 + $0x10] sm:$0xf]
        %v1007 = vld [vmem:[%s1001 + $0x14] sm:$0xf]
        %v1008 = vld [vmem:[%s1001 + $0x18] sm:$0xf]
        %v1009 = vld [vmem:[%s1001 + $0x1c] sm:$0xf]
        %s1010 = scalar_lea.vmem %s3, 128
        %v1011 = vld [vmem:[%s1010] sm:$0xff]
        %v1012 = vld [vmem:[%s1010 + $0x8] sm:$0xff]
        %v1013 = vld [vmem:[%s1010 + $0x10] sm:$0xff]
        %v1014 = vld [vmem:[%s1010 + $0x18] sm:$0xff]
        %v1015 = vld [vmem:[%s1010 + $0x20] sm:$0xff]
        %v1016 = vld [vmem:[%s1010 + $0x28] sm:$0xff]
        %v1017 = vld [vmem:[%s1010 + $0x30] sm:$0xff]
        %v1018 = vld [vmem:[%s1010 + $0x38] sm:$0xff]
        %1020 = vset.pattern.permute.xlu0 0
        %1021 = vperm.xlu0 %1020, %v1011
        %v1022 = vpop.permute.xlu0 %1021
        %1025 = vset.pattern.permute.xlu0 0
        %1026 = vperm.xlu0 %1025, %v1012
        %v1027 = vpop.permute.xlu0 %1026
        %1030 = vset.pattern.permute.xlu0 0
        %1031 = vperm.xlu0 %1030, %v1013
        %v1032 = vpop.permute.xlu0 %1031
        %1035 = vset.pattern.permute.xlu0 0
        %1036 = vperm.xlu0 %1035, %v1014
        %v1037 = vpop.permute.xlu0 %1036
        %1040 = vset.pattern.permute.xlu0 0
        %1041 = vperm.xlu0 %1040, %v1015
        %v1042 = vpop.permute.xlu0 %1041
        %1045 = vset.pattern.permute.xlu0 0
        %1046 = vperm.xlu0 %1045, %v1016
        %v1047 = vpop.permute.xlu0 %1046
        %1050 = vset.pattern.permute.xlu0 0
        %1051 = vperm.xlu0 %1050, %v1017
        %v1052 = vpop.permute.xlu0 %1051
        %1055 = vset.pattern.permute.xlu0 0
        %1056 = vperm.xlu0 %1055, %v1018
        %v1057 = vpop.permute.xlu0 %1056
        %v1067 = vunpack.c.l.b16 %v1002
        %v1068 = vunpack.c.l.b16 %v1003
        %v1069 = vunpack.c.l.b16 %v1004
        %v1070 = vunpack.c.l.b16 %v1005
        %v1071 = vunpack.c.l.b16 %v1006
        %v1072 = vunpack.c.l.b16 %v1007
        %v1073 = vunpack.c.l.b16 %v1008
        %v1074 = vunpack.c.l.b16 %v1009
        %v1075 = vpack.c.b16 %v1068, %v1067
        %v1076 = vpack.c.b16 %v1070, %v1069
        %v1077 = vpack.c.b16 %v1072, %v1071
        %v1078 = vpack.c.b16 %v1074, %v1073
        %v1083 = vunpack.c.l.b16 %v989
        %v1084 = vunpack.c.h.b16 %v989
        %v1085 = vunpack.c.l.b16 %v990
        %v1086 = vunpack.c.h.b16 %v990
        %v1087 = vunpack.c.l.b16 %v991
        %v1088 = vunpack.c.h.b16 %v991
        %v1089 = vunpack.c.l.b16 %v992
        %v1090 = vunpack.c.h.b16 %v992
        %v1091 = vpack.c.b16 %v1085, %v1083
        %v1092 = vpack.c.b16 %v1086, %v1084
        %v1093 = vpack.c.b16 %v1089, %v1087
        %v1094 = vpack.c.b16 %v1090, %v1088
        %v1100 = vsel %vm441, %v1075, 0
        %v1103 = vsel %vm441, %v1076, 0
        %v1106 = vsel %vm441, %v1077, 0
        %v1109 = vsel %vm441, %v1078, 0
        %1111 = vmatpush.bf16.msra.mxu0 0
        %1112 = vmatpush.bf16.msra.mxu0 0
        %1113 = vmatpush.bf16.msra.mxu0 0
        %1114 = vmatpush.bf16.msra.mxu0 0
        %1115 = vmatpush.bf16.msra.mxu0 0
        %1116 = vmatpush.bf16.msra.mxu0 0
        %1117 = vmatpush.bf16.msra.mxu0 %v1093
        %1118 = vmatpush.bf16.msra.mxu0 %v1091
        %1119 = vmatmul.bf16.gmra.mxu0 %v1100
        %v1120 = vpop.f32.mrf.mxu0
        %v1121 = vadd.f32 %v1022, %v1120
        %v1122 = vpop.f32.mrf.mxu0
        %v1123 = vadd.f32 %v1027, %v1122
        %1124 = vmatmul.bf16.gmra.mxu0 %v1103
        %v1125 = vpop.f32.mrf.mxu0
        %v1126 = vadd.f32 %v1032, %v1125
        %v1127 = vpop.f32.mrf.mxu0
        %v1128 = vadd.f32 %v1037, %v1127
        %1129 = vmatmul.bf16.gmra.mxu0 %v1106
        %v1130 = vpop.f32.mrf.mxu0
        %v1131 = vadd.f32 %v1042, %v1130
        %v1132 = vpop.f32.mrf.mxu0
        %v1133 = vadd.f32 %v1047, %v1132
        %1134 = vmatmul.bf16.gmra.mxu0 %v1109
        %v1135 = vpop.f32.mrf.mxu0
        %v1136 = vadd.f32 %v1052, %v1135
        %v1137 = vpop.f32.mrf.mxu0
        %v1138 = vadd.f32 %v1057, %v1137
        %1139 = vdwg.mxu0
        %1140 = vmatpush.bf16.msra.mxu0 0
        %1141 = vmatpush.bf16.msra.mxu0 0
        %1142 = vmatpush.bf16.msra.mxu0 0
        %1143 = vmatpush.bf16.msra.mxu0 0
        %1144 = vmatpush.bf16.msra.mxu0 0
        %1145 = vmatpush.bf16.msra.mxu0 0
        %1146 = vmatpush.bf16.msra.mxu0 %v1094
        %1147 = vmatpush.bf16.msra.mxu0 %v1092
        %1148 = vmatmul.bf16.gmra.mxu0 %v1100
        %v1149 = vpop.f32.mrf.mxu0
        %v1150 = vadd.f32 %v1022, %v1149
        %v1151 = vpop.f32.mrf.mxu0
        %v1152 = vadd.f32 %v1027, %v1151
        %1153 = vmatmul.bf16.gmra.mxu0 %v1103
        %v1154 = vpop.f32.mrf.mxu0
        %v1155 = vadd.f32 %v1032, %v1154
        %v1156 = vpop.f32.mrf.mxu0
        %v1157 = vadd.f32 %v1037, %v1156
        %1158 = vmatmul.bf16.gmra.mxu0 %v1106
        %v1159 = vpop.f32.mrf.mxu0
        %v1160 = vadd.f32 %v1042, %v1159
        %v1161 = vpop.f32.mrf.mxu0
        %v1162 = vadd.f32 %v1047, %v1161
        %1163 = vmatmul.bf16.gmra.mxu0 %v1109
        %v1164 = vpop.f32.mrf.mxu0
        %v1165 = vadd.f32 %v1052, %v1164
        %v1166 = vpop.f32.mrf.mxu0
        %v1167 = vadd.f32 %v1057, %v1166
        %1168 = vdwg.mxu0
        %v1169 = vmax.f32 %v1121, 0.0
        %v1170 = vmax.f32 %v1150, 0.0
        %v1171 = vmax.f32 %v1123, 0.0
        %v1172 = vmax.f32 %v1152, 0.0
        %v1173 = vmax.f32 %v1126, 0.0
        %v1174 = vmax.f32 %v1155, 0.0
        %v1175 = vmax.f32 %v1128, 0.0
        %v1176 = vmax.f32 %v1157, 0.0
        %v1177 = vmax.f32 %v1131, 0.0
        %v1178 = vmax.f32 %v1160, 0.0
        %v1179 = vmax.f32 %v1133, 0.0
        %v1180 = vmax.f32 %v1162, 0.0
        %v1181 = vmax.f32 %v1136, 0.0
        %v1182 = vmax.f32 %v1165, 0.0
        %v1183 = vmax.f32 %v1138, 0.0
        %v1184 = vmax.f32 %v1167, 0.0
        %s1185 = scalar_lea.vmem %s4, 32
        %v1186 = vld [vmem:[%s1185] sm:$0xf]
        %v1187 = vld [vmem:[%s1185 + $0x4] sm:$0xf]
        %v1188 = vld [vmem:[%s1185 + $0x8] sm:$0xf]
        %v1189 = vld [vmem:[%s1185 + $0xc] sm:$0xf]
        %v1190 = vpack.c.bf16 %v1171, %v1169
        %v1191 = vpack.c.bf16 %v1172, %v1170
        %v1192 = vpack.c.bf16 %v1175, %v1173
        %v1193 = vpack.c.bf16 %v1176, %v1174
        %v1194 = vpack.c.bf16 %v1179, %v1177
        %v1195 = vpack.c.bf16 %v1180, %v1178
        %v1196 = vpack.c.bf16 %v1183, %v1181
        %v1197 = vpack.c.bf16 %v1184, %v1182
        %s1198 = scalar_lea.vmem %s5, 64
        %v1199 = vld [vmem:[%s1198] sm:$0xff]
        %v1200 = vld [vmem:[%s1198 + $0x8] sm:$0xff]
        %v1201 = vld [vmem:[%s1198 + $0x10] sm:$0xff]
        %v1202 = vld [vmem:[%s1198 + $0x18] sm:$0xff]
        %1204 = vset.pattern.permute.xlu0 0
        %1205 = vperm.xlu0 %1204, %v1199
        %v1206 = vpop.permute.xlu0 %1205
        %1209 = vset.pattern.permute.xlu0 0
        %1210 = vperm.xlu0 %1209, %v1200
        %v1211 = vpop.permute.xlu0 %1210
        %1214 = vset.pattern.permute.xlu0 0
        %1215 = vperm.xlu0 %1214, %v1201
        %v1216 = vpop.permute.xlu0 %1215
        %1219 = vset.pattern.permute.xlu0 0
        %1220 = vperm.xlu0 %1219, %v1202
        %v1221 = vpop.permute.xlu0 %1220
        %v1227 = vunpack.c.l.b16 %v1186
        %v1228 = vunpack.c.l.b16 %v1187
        %v1229 = vunpack.c.l.b16 %v1188
        %v1230 = vunpack.c.l.b16 %v1189
        %v1231 = vpack.c.b16 %v1228, %v1227
        %v1232 = vpack.c.b16 %v1230, %v1229
        %v1234 = vsel %vm574, %v1231, 0
        %v1237 = vsel %vm574, %v1232, 0
        %1239 = vmatpush.bf16.msra.mxu0 0
        %1240 = vmatpush.bf16.msra.mxu0 0
        %1241 = vmatpush.bf16.msra.mxu0 0
        %1242 = vmatpush.bf16.msra.mxu0 0
        %1243 = vmatpush.bf16.msra.mxu0 %v1196
        %1244 = vmatpush.bf16.msra.mxu0 %v1194
        %1245 = vmatpush.bf16.msra.mxu0 %v1192
        %1246 = vmatpush.bf16.msra.mxu0 %v1190
        %1247 = vmatmul.bf16.gmra.mxu0 %v1234
        %v1248 = vpop.f32.mrf.mxu0
        %v1249 = vadd.f32 %v1206, %v1248
        %v1250 = vpop.f32.mrf.mxu0
        %v1251 = vadd.f32 %v1211, %v1250
        %1252 = vmatmul.bf16.gmra.mxu0 %v1237
        %v1253 = vpop.f32.mrf.mxu0
        %v1254 = vadd.f32 %v1216, %v1253
        %v1255 = vpop.f32.mrf.mxu0
        %v1256 = vadd.f32 %v1221, %v1255
        %1257 = vdwg.mxu0
        %1258 = vmatpush.bf16.msra.mxu0 0
        %1259 = vmatpush.bf16.msra.mxu0 0
        %1260 = vmatpush.bf16.msra.mxu0 0
        %1261 = vmatpush.bf16.msra.mxu0 0
        %1262 = vmatpush.bf16.msra.mxu0 %v1197
        %1263 = vmatpush.bf16.msra.mxu0 %v1195
        %1264 = vmatpush.bf16.msra.mxu0 %v1193
        %1265 = vmatpush.bf16.msra.mxu0 %v1191
        %1266 = vmatmul.bf16.gmra.mxu0 %v1234
        %v1267 = vpop.f32.mrf.mxu0
        %v1268 = vadd.f32 %v1206, %v1267
        %v1269 = vpop.f32.mrf.mxu0
        %v1270 = vadd.f32 %v1211, %v1269
        %1271 = vmatmul.bf16.gmra.mxu0 %v1237
        %v1272 = vpop.f32.mrf.mxu0
        %v1273 = vadd.f32 %v1216, %v1272
        %v1274 = vpop.f32.mrf.mxu0
        %v1275 = vadd.f32 %v1221, %v1274
        %1276 = vdwg.mxu0
        %s1277 = scalar_lea.vmem %s0, 2
        %v1278 = vld [vmem:[%s1277] sm:$0x1]
        %v1280 = vperm.slane %v1278, 0
        %1281 = vset.pattern.permute.xlu0 0
        %1282 = vperm.xlu0 %1281, %v1280
        %v1283 = vpop.permute.xlu0 %1282
        %v1285 = vmul.f32 %v1283, %v993
        %v1286 = vmul.f32 %v1283, %v994
        %v1287 = vmul.f32 %v1283, %v995
        %v1288 = vmul.f32 %v1283, %v996
        %v1289 = vmul.f32 %v1283, %v997
        %v1290 = vmul.f32 %v1283, %v998
        %v1291 = vmul.f32 %v1283, %v999
        %v1292 = vmul.f32 %v1283, %v1000
        %v1293 = vmul.f32 %v1285, %v1249
        %v1294 = vmul.f32 %v1286, %v1268
        %v1295 = vmul.f32 %v1287, %v1251
        %v1296 = vmul.f32 %v1288, %v1270
        %v1297 = vmul.f32 %v1289, %v1254
        %v1298 = vmul.f32 %v1290, %v1273
        %v1299 = vmul.f32 %v1291, %v1256
        %v1300 = vmul.f32 %v1292, %v1275
        %v1301 = vadd.f32 %v1293, %v993
        %v1302 = vadd.f32 %v1294, %v994
        %v1303 = vadd.f32 %v1295, %v995
        %v1304 = vadd.f32 %v1296, %v996
        %v1305 = vadd.f32 %v1297, %v997
        %v1306 = vadd.f32 %v1298, %v998
        %v1307 = vadd.f32 %v1299, %v999
        %v1308 = vadd.f32 %v1300, %v1000
        %s1309 = scalar_lea.vmem %s329, 128 [#allocation3]
        %1310 = vst [vmem:[%s1309] sm:$0xff] %v1301
        %1311 = vst [vmem:[%s1309 + $0x8] sm:$0xff] %v1302
        %1312 = vst [vmem:[%s1309 + $0x10] sm:$0xff] %v1303
        %1313 = vst [vmem:[%s1309 + $0x18] sm:$0xff] %v1304
        %1314 = vst [vmem:[%s1309 + $0x20] sm:$0xff] %v1305
        %1315 = vst [vmem:[%s1309 + $0x28] sm:$0xff] %v1306
        %1316 = vst [vmem:[%s1309 + $0x30] sm:$0xff] %v1307
        %1317 = vst [vmem:[%s1309 + $0x38] sm:$0xff] %v1308
        %s1318 = sand.u32 %s159, 1
        %s1319 = scalar_lea.sflag [#allocation4], %s1318
        %s1320 = sand.u32 %s159, 1
        %s1321 = smul.addr %s1320, 192
        %s1322 = scalar_lea.vmem [#allocation3], %s1321
        // Predicated region
        $region83: #{tpu_custom_call.1} parent=77 // pred_check
          %p1323 = pneg %p169
        $region84: #{tpu_custom_call.1} parent=77 // pred_check_branch
          %1325 = sbr.rel (%p1323) target = $region86
        $region85: #{tpu_custom_call.1} parent=77 // pred_region
          %s1326 = smul.u32 2, %s20
          %1328 = vsyncadd %s1319, 0
          %s1329 = smul.addr %s1326, 8
          %s1330 = scalar_lea.hbm %s6, %s1329
          %s1331 = sshll.u32 %s1322, 4
          %s1332 = int_to_ptr.vmem [resolvable:$true] %s1331
          %s1333 = sshll.u32 %s1330, 4
          %s1334 = int_to_ptr.hbm [resolvable:$true] %s1333
          %1339 = dma.vmem_to_hbm [thread:$0]  %s1332, 3072, %s1334, %s1319, 256, 512, 16
        $region86: #{tpu_custom_call.1} parent=77 // pred_fallthru
          _
      $region78: #{tpu_custom_call.1} parent=5 // pred_fallthru
        _
      %p1340 = scmp.le.s32.totalorder 2, %s15
      // Predicated region
      $region87: #{tpu_custom_call.1} parent=5 // pred_check
        %p1341 = pneg %p1340
      $region88: #{tpu_custom_call.1} parent=5 // pred_check_branch
        %1343 = sbr.rel (%p1341) target = $region90
      $region89: #{tpu_custom_call.1} parent=5 // pred_region
        %s1344 = ssub.s32 %s15, 2
        // Predicated region
        $region91: #{tpu_custom_call.1} parent=89 // pred_check
          %p1345 = pneg %p175
        $region92: #{tpu_custom_call.1} parent=89 // pred_check_branch
          %1347 = sbr.rel (%p1345) target = $region94
        $region93: #{tpu_custom_call.1} parent=89 // pred_region
          %s1348 = sand.u32 %s160, 1
          %s1349 = scalar_lea.sflag [#allocation4], %s1348
          %s1350 = sand.u32 %s160, 1
          %s1351 = smul.addr %s1350, 192
          %s1352 = scalar_lea.vmem [#allocation3], %s1351
          %1354 = dma.done %s1349, 3072
        $region94: #{tpu_custom_call.1} parent=89 // pred_fallthru
          _
      $region90: #{tpu_custom_call.1} parent=5 // pred_fallthru
        _
    $region6: #{tpu_custom_call.1} parent=1 // loop_footer
      %s19 = sadd.s32 1, %s15
    $region7: #{tpu_custom_call.1} parent=1 // loop_footer_branch
      %14 = sbr.rel target = $region3
    $region8: #{tpu_custom_call.1} parent=1 // loop_exit
      _
    %1355 = vsyncpa [#allocation4], 1
    %s1356 = scalar_lea.sflag [#allocation4], 1
    %1357 = vsyncpa %s1356, 1

</llo_original>
